<compile_context>
chip_gen: v7x
topology: tpu7x:2x2x1
jax: 0.10.0
libtpu: 0.0.40
codegen_flags: <defaults>
</compile_context>

<pallas_src>
import math
import numpy as np

import jax
import jax.numpy as jnp
from jax.experimental import pallas as pl
from jax.experimental.pallas import tpu as pltpu

# ----------------------------------------------------------------------------
# Compile-time constants: the gaussian window of SSIM (window_size=11,
# sigma=1.5), identical to create_window() in the PyTorch module.
# ----------------------------------------------------------------------------
WINDOW = 11
PAD = WINDOW // 2  # 5
_SIGMA = 1.5
_g = [math.exp(-((x - WINDOW // 2) ** 2) / (2.0 * _SIGMA ** 2)) for x in range(WINDOW)]
_gs = sum(_g)
GAUSS = np.asarray([v / _gs for v in _g], dtype=np.float32)

C1 = 0.01 ** 2
C2 = 0.03 ** 2


def _toeplitz_band(n):
    """(n, n) banded Toeplitz T with T[i, k] = GAUSS[k - i + PAD], 0 off-band.

    A_v @ x (resp. x @ A_h) is exactly the 1-D gaussian convolution of the
    columns (resp. rows) of x with zero 'same' padding — identical to
    F.conv2d(..., padding=window_size // 2) applied separably.  (T is
    symmetric since the gaussian taps are symmetric.)
    """
    idx = np.arange(n)
    d = idx[None, :] - idx[:, None]  # k - i
    vals = GAUSS[np.clip(d + PAD, 0, WINDOW - 1)]
    return np.where(np.abs(d) <= PAD, vals, 0.0).astype(np.float32)


# ----------------------------------------------------------------------------
# Kernel: one grid step = one block of Gb planes in natural (Gb, H, W) layout.
# ----------------------------------------------------------------------------
def _loss_kernel(av_ref, ah_ref, rec_ref, org_ref, out_ref):
    """av_ref : (H, H)  vertical gaussian Toeplitz band
    ah_ref : (W, W)  horizontal gaussian Toeplitz band
    rec_ref: (Gb, H, W) reconstructed planes (img1 in the torch code)
    org_ref: (Gb, H, W) original planes      (img2 in the torch code)
    out_ref: (1, 8, 128) partial sums: [0,0,0] = sum((rec-org)^2),
                                       [0,0,1] = sum(clamped ssim_map)
    """
    gb, H, W = rec_ref.shape
    rec = rec_ref[...]
    org = org_ref[...]
    av = av_ref[...]
    ah = ah_ref[...]

    # Fused operand: all five fields SSIM needs convolved, stacked on planes.
    stacked = jnp.concatenate(
        [rec, org, rec * rec, org * org, rec * org], axis=0)        # (5gb, H, W)
    b5 = 5 * gb

    # Vertical gaussian pass: batched (H,H) @ (H,W) matmul per plane.
    av_b = jnp.broadcast_to(av, (b5, H, H))
    v = jnp.einsum('bhk,bkw->bhw', av_b, stacked,
                   preferred_element_type=jnp.float32)              # (5gb, H, W)

    # Horizontal gaussian pass: one (5gb*H, W) @ (W, W) matmul on the lane axis.
    c = jnp.dot(v.reshape(b5 * H, W), ah,
                preferred_element_type=jnp.float32).reshape(5, gb, H, W)

    mu1, mu2, e11, e22, e12 = c[0], c[1], c[2], c[3], c[4]
    mu1_sq = mu1 * mu1
    mu2_sq = mu2 * mu2
    mu1_mu2 = mu1 * mu2
    sigma1_sq = e11 - mu1_sq
    sigma2_sq = e22 - mu2_sq
    sigma12 = e12 - mu1_mu2

    ssim_map = ((2.0 * mu1_mu2 + C1) * (2.0 * sigma12 + C2)) / (
        (mu1_sq + mu2_sq + C1) * (sigma1_sq + sigma2_sq + C2))
    ssim_map = jnp.clip(ssim_map, 0.0, 1.0)  # matches torch.clamp(ssim_map, 0, 1)

    diff = rec - org
    err_sum = jnp.sum(diff * diff)
    ssim_sum = jnp.sum(ssim_map)

    # Per-block partial sums into an independent lane-aligned (8,128) tile.
    sub = jax.lax.broadcasted_iota(jnp.int32, (8, 128), 0)
    lane = jax.lax.broadcasted_iota(jnp.int32, (8, 128), 1)
    tile = jnp.where((sub == 0) & (lane == 0), err_sum,
                     jnp.where((sub == 0) & (lane == 1), ssim_sum,
                               jnp.float32(0.0)))
    out_ref[0] = tile


# ----------------------------------------------------------------------------
# Block-plane selection (per-generation VMEM budget, >= 2 blocks for v7x).
# ----------------------------------------------------------------------------
def _vmem_estimate(gb, H, W):
    plane = H * W * 4
    io = 2 * 2 * gb * plane            # rec + org blocks, double buffered
    stacked = 5 * gb * plane           # fused conv operand
    conv = 2 * 5 * gb * plane          # vertical + horizontal results
    av_b = 5 * gb * H * H * 4          # broadcast vertical band
    temps = 8 * gb * plane             # ssim elementwise intermediates
    bands = 2 * (H * H + W * W) * 4    # A_v + A_h (double buffered)
    out = 2 * 8 * 128 * 4
    return io + stacked + conv + av_b + temps + bands + out


def _choose_block_planes(G, H, W, budget):
    divisors = [d for d in range(1, G + 1) if G % d == 0]
    # Prefer >= 2 grid blocks so a "parallel" grid axis can shard across both
    # TensorCores on v7x (irrelevant but harmless on single-TC v5e/v6e).
    preferred = [d for d in divisors if G // d >= 2] or divisors
    fitting = [d for d in preferred if _vmem_estimate(d, H, W) <= budget]
    if fitting:
        return max(fitting)
    return 1  # smallest possible block; estimate may still exceed the budget


# ----------------------------------------------------------------------------
# Wrapper
# ----------------------------------------------------------------------------
@jax.jit
def reconstruction_loss(original, reconstructed):
    """Pallas implementation of ReconstructionLoss.forward(original, reconstructed)."""
    B, C, H, W = original.shape
    G = B * C

    org = original.astype(jnp.float32).reshape(G, H, W)
    rec = reconstructed.astype(jnp.float32).reshape(G, H, W)

    try:
        vmem_cap = int(pltpu.get_tpu_info().vmem_capacity_bytes)
    except Exception:
        vmem_cap = 64 << 20  # conservative (v7x-sized) fallback
    budget = vmem_cap // 2

    Gb = _choose_block_planes(G, H, W, budget)
    num_blocks = G // Gb

    a_v = jnp.asarray(_toeplitz_band(H))
    a_h = jnp.asarray(_toeplitz_band(W))

    est = _vmem_estimate(Gb, H, W)
    vmem_limit = int(min(vmem_cap * 3 // 4, max(2 * est, 32 << 20)))

    partials = pl.pallas_call(
        _loss_kernel,
        out_shape=jax.ShapeDtypeStruct((num_blocks, 8, 128), jnp.float32),
        grid_spec=pltpu.PrefetchScalarGridSpec(
            num_scalar_prefetch=0,
            grid=(num_blocks,),
            in_specs=[
                # Grid-invariant gaussian bands (small; double-buffered by
                # default — single-buffering them is a minor VMEM cleanup).
                pl.BlockSpec((H, H), lambda i: (0, 0)),
                pl.BlockSpec((W, W), lambda i: (0, 0)),
                # Natural-layout plane blocks: contiguous DMA, no transpose.
                pl.BlockSpec((Gb, H, W), lambda i: (i, 0, 0)),
                pl.BlockSpec((Gb, H, W), lambda i: (i, 0, 0)),
            ],
            out_specs=pl.BlockSpec((1, 8, 128), lambda i: (i, 0, 0)),
        ),
        compiler_params=pltpu.CompilerParams(
            dimension_semantics=("parallel",),
            vmem_limit_bytes=vmem_limit),
    )(a_v, a_h, rec, org)

    n = jnp.float32(G * H * W)
    mse = jnp.sum(partials[:, 0, 0]) / n
    ssim_mean = jnp.sum(partials[:, 0, 1]) / n
    return mse + (jnp.float32(1.0) - ssim_mean)


# ----------------------------------------------------------------------------
# Pure-JAX reference (mirrors the PyTorch code) for a sanity check.
# ----------------------------------------------------------------------------
def _reference_loss(original, reconstructed):
    B, C, H, W = original.shape
    g = jnp.asarray(GAUSS, jnp.float32)
    w2d = jnp.outer(g, g)
    window = jnp.broadcast_to(w2d[None, None], (C, 1, WINDOW, WINDOW))

    def conv(x):
        return jax.lax.conv_general_dilated(
            x, window, window_strides=(1, 1), padding=[(PAD, PAD), (PAD, PAD)],
            dimension_numbers=("NCHW", "OIHW", "NCHW"), feature_group_count=C)

    img1, img2 = reconstructed, original  # ssim(reconstructed, original)
    mu1, mu2 = conv(img1), conv(img2)
    mu1_sq, mu2_sq, mu1_mu2 = mu1 * mu1, mu2 * mu2, mu1 * mu2
    sigma1_sq = conv(img1 * img1) - mu1_sq
    sigma2_sq = conv(img2 * img2) - mu2_sq
    sigma12 = conv(img1 * img2) - mu1_mu2
    ssim_map = ((2 * mu1_mu2 + C1) * (2 * sigma12 + C2)) / (
        (mu1_sq + mu2_sq + C1) * (sigma1_sq + sigma2_sq + C2))
    ssim_map = jnp.clip(ssim_map, 0.0, 1.0)
    ssim_loss = 1.0 - jnp.mean(ssim_map)
    mse_loss = jnp.mean((reconstructed - original) ** 2)
    return mse_loss + ssim_loss


if __name__ == "__main__":
    key = jax.random.PRNGKey(0)
    k1, k2 = jax.random.split(key)
    B, C, H, W = 2, 4, 16, 16
    original = jax.random.uniform(k1, (B, C, H, W), dtype=jnp.float32)
    reconstructed = jnp.clip(
        original + 0.1 * jax.random.normal(k2, (B, C, H, W), dtype=jnp.float32),
        0.0, 1.0)

    loss = jax.block_until_ready(reconstruction_loss(original, reconstructed))
    ref = jax.block_until_ready(_reference_loss(original, reconstructed))

    assert jnp.isfinite(loss), "loss is not finite"
    assert abs(float(loss) - float(ref)) < 1e-3, (float(loss), float(ref))
    print("KERNEL_OK")
</pallas_src>

<mosaic_0001>
module attributes {stable_mosaic.version = 11 : i64} {
  func.func @_loss_kernel(%arg0: i32, %arg1: memref<16x16xf32, #tpu.memory_space<vmem>>, %arg2: memref<16x16xf32, #tpu.memory_space<vmem>>, %arg3: memref<4x16x16xf32, #tpu.memory_space<vmem>>, %arg4: memref<4x16x16xf32, #tpu.memory_space<vmem>>, %arg5: memref<1x8x128xf32, #tpu.memory_space<vmem>>) attributes {dimension_semantics = [#tpu.dimension_semantics<parallel>], iteration_bounds = array<i64: 2>, scalar_prefetch = 0 : i64, scratch_operands = 0 : i64, tpu.core_type = #tpu.core_type<tc>, window_params = [{pipeline_mode = #tpu.pipeline_mode<synchronous>, transform_indices = @transform_0, window_bounds = array<i64: 16, 16>}, {pipeline_mode = #tpu.pipeline_mode<synchronous>, transform_indices = @transform_1, window_bounds = array<i64: 16, 16>}, {transform_indices = @transform_2, window_bounds = array<i64: 4, 16, 16>}, {transform_indices = @transform_3, window_bounds = array<i64: 4, 16, 16>}, {transform_indices = @transform_4, window_bounds = array<i64: 1, 8, 128>}]} {
    %c0 = arith.constant 0 : index
    %c0_0 = arith.constant 0 : index
    %c0_1 = arith.constant 0 : index
    %0 = vector.load %arg3[%c0, %c0_0, %c0_1] : memref<4x16x16xf32, #tpu.memory_space<vmem>>, vector<4x16x16xf32>
    %c0_2 = arith.constant 0 : index
    %c0_3 = arith.constant 0 : index
    %c0_4 = arith.constant 0 : index
    %1 = vector.load %arg4[%c0_2, %c0_3, %c0_4] : memref<4x16x16xf32, #tpu.memory_space<vmem>>, vector<4x16x16xf32>
    %c0_5 = arith.constant 0 : index
    %c0_6 = arith.constant 0 : index
    %2 = vector.load %arg1[%c0_5, %c0_6] : memref<16x16xf32, #tpu.memory_space<vmem>>, vector<16x16xf32>
    %c0_7 = arith.constant 0 : index
    %c0_8 = arith.constant 0 : index
    %3 = vector.load %arg2[%c0_7, %c0_8] : memref<16x16xf32, #tpu.memory_space<vmem>>, vector<16x16xf32>
    %4 = arith.mulf %0, %0 : vector<4x16x16xf32>
    %5 = arith.mulf %1, %1 : vector<4x16x16xf32>
    %6 = arith.mulf %0, %1 : vector<4x16x16xf32>
    %7 = tpu.concatenate %0, %1, %4, %5, %6 in 0 : vector<4x16x16xf32>, vector<4x16x16xf32>, vector<4x16x16xf32>, vector<4x16x16xf32>, vector<4x16x16xf32> -> vector<20x16x16xf32>
    %8 = vector.shape_cast %2 : vector<16x16xf32> to vector<1x16x16xf32>
    %9 = vector.broadcast %8 : vector<1x16x16xf32> to vector<20x16x16xf32>
    "tpu.trace_start"() <{level = 10 : i32, message = "bhk,bkw->bhw"}> : () -> ()
    %cst = arith.constant dense<0.000000e+00> : vector<20x16x16xf32>
    %10 = tpu.matmul %9, %7, %cst {dimension_numbers = #tpu.dot_dimension_numbers<[2], [1], [1], [2], [0, 0, 0, 1, 1, 2], [0], [0]>} : vector<20x16x16xf32>, vector<20x16x16xf32>, vector<20x16x16xf32> -> vector<20x16x16xf32>
    "tpu.trace_stop"() : () -> ()
    %11 = vector.shape_cast %10 : vector<20x16x16xf32> to vector<320x16xf32>
    %cst_9 = arith.constant dense<0.000000e+00> : vector<320x16xf32>
    %12 = tpu.matmul %11, %3, %cst_9 {dimension_numbers = #tpu.dot_dimension_numbers<[1], [0], [0], [1], [0, 0, 1, 1], [], []>} : vector<320x16xf32>, vector<16x16xf32>, vector<320x16xf32> -> vector<320x16xf32>
    %13 = vector.shape_cast %12 : vector<320x16xf32> to vector<5x4x16x16xf32>
    %14 = vector.extract_strided_slice %13 {offsets = [0, 0, 0, 0], sizes = [1, 4, 16, 16], strides = [1, 1, 1, 1]} : vector<5x4x16x16xf32> to vector<1x4x16x16xf32>
    %15 = vector.shape_cast %14 : vector<1x4x16x16xf32> to vector<4x16x16xf32>
    %16 = vector.extract_strided_slice %13 {offsets = [1, 0, 0, 0], sizes = [1, 4, 16, 16], strides = [1, 1, 1, 1]} : vector<5x4x16x16xf32> to vector<1x4x16x16xf32>
    %17 = vector.shape_cast %16 : vector<1x4x16x16xf32> to vector<4x16x16xf32>
    %18 = vector.extract_strided_slice %13 {offsets = [2, 0, 0, 0], sizes = [1, 4, 16, 16], strides = [1, 1, 1, 1]} : vector<5x4x16x16xf32> to vector<1x4x16x16xf32>
    %19 = vector.shape_cast %18 : vector<1x4x16x16xf32> to vector<4x16x16xf32>
    %20 = vector.extract_strided_slice %13 {offsets = [3, 0, 0, 0], sizes = [1, 4, 16, 16], strides = [1, 1, 1, 1]} : vector<5x4x16x16xf32> to vector<1x4x16x16xf32>
    %21 = vector.shape_cast %20 : vector<1x4x16x16xf32> to vector<4x16x16xf32>
    %22 = vector.extract_strided_slice %13 {offsets = [4, 0, 0, 0], sizes = [1, 4, 16, 16], strides = [1, 1, 1, 1]} : vector<5x4x16x16xf32> to vector<1x4x16x16xf32>
    %23 = vector.shape_cast %22 : vector<1x4x16x16xf32> to vector<4x16x16xf32>
    %24 = arith.mulf %15, %15 : vector<4x16x16xf32>
    %25 = arith.mulf %17, %17 : vector<4x16x16xf32>
    %26 = arith.mulf %15, %17 : vector<4x16x16xf32>
    %27 = arith.subf %19, %24 : vector<4x16x16xf32>
    %28 = arith.subf %21, %25 : vector<4x16x16xf32>
    %29 = arith.subf %23, %26 : vector<4x16x16xf32>
    %cst_10 = arith.constant 2.000000e+00 : f32
    %30 = vector.broadcast %cst_10 : f32 to vector<4x16x16xf32>
    %31 = arith.mulf %30, %26 : vector<4x16x16xf32>
    %cst_11 = arith.constant 9.99999974E-5 : f32
    %32 = vector.broadcast %cst_11 : f32 to vector<4x16x16xf32>
    %33 = arith.addf %31, %32 : vector<4x16x16xf32>
    %cst_12 = arith.constant 2.000000e+00 : f32
    %34 = vector.broadcast %cst_12 : f32 to vector<4x16x16xf32>
    %35 = arith.mulf %34, %29 : vector<4x16x16xf32>
    %cst_13 = arith.constant 8.99999984E-4 : f32
    %36 = vector.broadcast %cst_13 : f32 to vector<4x16x16xf32>
    %37 = arith.addf %35, %36 : vector<4x16x16xf32>
    %38 = arith.mulf %33, %37 : vector<4x16x16xf32>
    %39 = arith.addf %24, %25 : vector<4x16x16xf32>
    %cst_14 = arith.constant 9.99999974E-5 : f32
    %40 = vector.broadcast %cst_14 : f32 to vector<4x16x16xf32>
    %41 = arith.addf %39, %40 : vector<4x16x16xf32>
    %42 = arith.addf %27, %28 : vector<4x16x16xf32>
    %cst_15 = arith.constant 8.99999984E-4 : f32
    %43 = vector.broadcast %cst_15 : f32 to vector<4x16x16xf32>
    %44 = arith.addf %42, %43 : vector<4x16x16xf32>
    %45 = arith.mulf %41, %44 : vector<4x16x16xf32>
    %46 = arith.divf %38, %45 : vector<4x16x16xf32>
    %cst_16 = arith.constant 0.000000e+00 : f32
    %cst_17 = arith.constant 1.000000e+00 : f32
    %47 = vector.broadcast %cst_16 : f32 to vector<4x16x16xf32>
    %48 = arith.maximumf %47, %46 : vector<4x16x16xf32>
    %49 = vector.broadcast %cst_17 : f32 to vector<4x16x16xf32>
    %50 = arith.minimumf %49, %48 : vector<4x16x16xf32>
    %51 = arith.subf %0, %1 : vector<4x16x16xf32>
    %52 = arith.mulf %51, %51 : vector<4x16x16xf32>
    %53 = vector.shape_cast %52 : vector<4x16x16xf32> to vector<1x4x16x16xf32>
    %cst_18 = arith.constant dense<0.000000e+00> : vector<1xf32>
    %54 = vector.multi_reduction <add>, %53, %cst_18 [1, 2, 3] : vector<1x4x16x16xf32> to vector<1xf32>
    %55 = vector.shape_cast %54 : vector<1xf32> to vector<1x1x1x1xf32>
    %56 = vector.extract %55[0, 0, 0, 0] : f32 from vector<1x1x1x1xf32>
    %57 = vector.shape_cast %50 : vector<4x16x16xf32> to vector<1x4x16x16xf32>
    %cst_19 = arith.constant dense<0.000000e+00> : vector<1xf32>
    %58 = vector.multi_reduction <add>, %57, %cst_19 [1, 2, 3] : vector<1x4x16x16xf32> to vector<1xf32>
    %59 = vector.shape_cast %58 : vector<1xf32> to vector<1x1x1x1xf32>
    %60 = vector.extract %59[0, 0, 0, 0] : f32 from vector<1x1x1x1xf32>
    %61 = tpu.iota {dimensions = array<i32: 0>} : vector<8x128xi32>
    %62 = tpu.iota {dimensions = array<i32: 1>} : vector<8x128xi32>
    %c0_i32 = arith.constant 0 : i32
    %63 = vector.broadcast %c0_i32 : i32 to vector<8x128xi32>
    %64 = arith.cmpi eq, %61, %63 : vector<8x128xi32>
    %c0_i32_20 = arith.constant 0 : i32
    %65 = vector.broadcast %c0_i32_20 : i32 to vector<8x128xi32>
    %66 = arith.cmpi eq, %62, %65 : vector<8x128xi32>
    %67 = arith.andi %64, %66 : vector<8x128xi1>
    %c0_i32_21 = arith.constant 0 : i32
    %68 = vector.broadcast %c0_i32_21 : i32 to vector<8x128xi32>
    %69 = arith.cmpi eq, %61, %68 : vector<8x128xi32>
    %c1_i32 = arith.constant 1 : i32
    %70 = vector.broadcast %c1_i32 : i32 to vector<8x128xi32>
    %71 = arith.cmpi eq, %62, %70 : vector<8x128xi32>
    %72 = arith.andi %69, %71 : vector<8x128xi1>
    %cst_22 = arith.constant 0.000000e+00 : f32
    %73 = vector.broadcast %60 : f32 to vector<8x128xf32>
    %74 = vector.broadcast %cst_22 : f32 to vector<8x128xf32>
    %75 = arith.select %72, %73, %74 : vector<8x128xi1>, vector<8x128xf32>
    %76 = vector.broadcast %56 : f32 to vector<8x128xf32>
    %77 = arith.select %67, %76, %75 : vector<8x128xi1>, vector<8x128xf32>
    %c0_23 = arith.constant 0 : index
    %c0_24 = arith.constant 0 : index
    %c0_25 = arith.constant 0 : index
    %78 = vector.load %arg5[%c0_23, %c0_24, %c0_25] : memref<1x8x128xf32, #tpu.memory_space<vmem>>, vector<1x8x128xf32>
    %79 = vector.shape_cast %78 : vector<1x8x128xf32> to vector<8x128xf32>
    %80 = vector.shape_cast %77 : vector<8x128xf32> to vector<1x8x128xf32>
    tpu.vector_store %arg5[%c0_23, %c0_24, %c0_25], %80 {strides = array<i32>} : memref<1x8x128xf32, #tpu.memory_space<vmem>>, vector<1x8x128xf32>,
    return
  }
  func.func @transform_0(%arg0: i32) -> (i32, i32) {
    %c0_i32 = arith.constant 0 : i32
    %c0_i32_0 = arith.constant 0 : i32
    %c0_i32_1 = arith.constant 0 : i32
    return %c0_i32, %c0_i32_0 : i32, i32
  }
  func.func @transform_1(%arg0: i32) -> (i32, i32) {
    %c0_i32 = arith.constant 0 : i32
    %c0_i32_0 = arith.constant 0 : i32
    %c0_i32_1 = arith.constant 0 : i32
    return %c0_i32, %c0_i32_0 : i32, i32
  }
  func.func @transform_2(%arg0: i32) -> (i32, i32, i32) {
    %c0_i32 = arith.constant 0 : i32
    %c0_i32_0 = arith.constant 0 : i32
    %c0_i32_1 = arith.constant 0 : i32
    return %arg0, %c0_i32, %c0_i32_0 : i32, i32, i32
  }
  func.func @transform_3(%arg0: i32) -> (i32, i32, i32) {
    %c0_i32 = arith.constant 0 : i32
    %c0_i32_0 = arith.constant 0 : i32
    %c0_i32_1 = arith.constant 0 : i32
    return %arg0, %c0_i32, %c0_i32_0 : i32, i32, i32
  }
  func.func @transform_4(%arg0: i32) -> (i32, i32, i32) {
    %c0_i32 = arith.constant 0 : i32
    %c0_i32_0 = arith.constant 0 : i32
    %c0_i32_1 = arith.constant 0 : i32
    return %arg0, %c0_i32, %c0_i32_0 : i32, i32, i32
  }
}

</mosaic_0001>

<llo_original>
// kernel: reconstruction_loss.1
$region0: #{reconstruction_loss.1}
  #allocation0 [shape = 'u32[]', space=smem, size = 0x4, offset = 0x4, fixed_abs, tag = 'smem constant byte address 0x4 - core index']
  #allocation1 [shape = 'u32[144,128]{1,0:T(1,128)}', space=vmem, size = 0x12000, scoped, tag = 'internal scratch']
  %s0 = inlined_call_operand.vmem [shape: f32[16,16], index: 0, kind: input, shape index: {}, may-alias: {0,1}]
  %s1 = inlined_call_operand.vmem [shape: f32[16,16], index: 1, kind: input, shape index: {}, may-alias: {0,1}]
  %s2 = inlined_call_operand.hbm [shape: f32[8,16,16], index: 2, kind: input, shape index: {}]
  %s3 = inlined_call_operand.hbm [shape: f32[8,16,16], index: 3, kind: input, shape index: {}]
  %s4 = inlined_call_operand.vmem [shape: f32[2,8,128], index: 4, kind: output, shape index: {}]
  %s5 = sld [smem:[#allocation0]]
  $region57: #{reconstruction_loss.1} parent=0
    _
  %s7 = ssub.s32 1, %s5
  %s8 = scalar_select 0, %s7, %s5
  $region1: #{reconstruction_loss.1} parent=0
    #allocation2 [shape = 'u8[65536]{0}', space=vmem, size = 0x10000, scoped, tag = 'input window, operand 2']
    #allocation3 [shape = 's32[2]{0}', space=sflag, size = 0x8, scoped, tag = 'scoped memory for reconstruction_loss.1']
    #allocation4 [shape = 'u8[65536]{0}', space=vmem, size = 0x10000, scoped, tag = 'input window, operand 3']
    #allocation5 [shape = 's32[2]{0}', space=sflag, size = 0x8, scoped, tag = 'scoped memory for reconstruction_loss.1']
    %9 = vsyncpa [#allocation3], 0
    %s10 = scalar_lea.sflag [#allocation3], 1
    %11 = vsyncpa %s10, 0
    %12 = vsyncpa [#allocation5], 0
    %s13 = scalar_lea.sflag [#allocation5], 1
    %14 = vsyncpa %s13, 0
    loop: start=0, step=1, limit=4
    $region2: #{reconstruction_loss.1} parent=1 // loop_pre_header
      _
    $region3: #{reconstruction_loss.1} parent=1 // loop_header
      %s16 = sphi 0, %s20
      %p17 = scmp.ge.s32.totalorder %s16, 4
      %s24 = sphi 0, %s24
      %s26 = sphi 0, %s24
      %s27 = sphi 0, %s26
      %s41 = sphi 0, %s27
      %s45 = sphi 0, %s45
      %s47 = sphi 0, %s45
      %s48 = sphi 0, %s47
      %s62 = sphi 0, %s48
      %s68 = sphi 0, %s70
      %s71 = sphi 0, %s68
      %s72 = sphi 0, %s71
      %s88 = sphi 0, %s72
      %s94 = sphi 0, %s96
      %s97 = sphi 0, %s94
      %s98 = sphi 0, %s97
      %s114 = sphi 0, %s98
      %s120 = sphi 0, %s122
      %s123 = sphi 0, %s120
      %s124 = sphi 0, %s123
      %s140 = sphi 0, %s124
    $region4: #{reconstruction_loss.1} parent=1 // loop_header_branch
      %19 = sbr.rel (%p17) target = $region8
    $region5: #{reconstruction_loss.1} parent=1 // loop_body
      %s21 = ssub.s32 %s16, 1
      %s22 = ssub.s32 %s16, 2
      %s23 = sadd.s32 %s16, 1
      %s25 = sadd.s32 %s24, 1
      %p28 = scmp.eq.s32.totalorder %s16, 1
      %p29 = scmp.ne.s32.totalorder %s24, %s26
      %p30 = scmp.eq.s32.totalorder %s16, 0
      %p31 = por %p29, %p30
      %p32 = scmp.ne.s32.totalorder %s24, %s26
      %p33 = scmp.eq.s32.totalorder %s21, 1
      %p34 = por %p32, %p33
      %p35 = scmp.ne.s32.totalorder %s26, %s27
      %p36 = scmp.eq.s32.totalorder %s21, 0
      %p37 = por %p35, %p36
      %p38 = scmp.ne.s32.totalorder %s26, %s27
      %p39 = scmp.eq.s32.totalorder %s22, 1
      %p40 = por %p38, %p39
      %p42 = scmp.ne.s32.totalorder %s27, %s41
      %p43 = scmp.eq.s32.totalorder %s22, 0
      %p44 = por %p42, %p43
      %s46 = sadd.s32 %s45, 1
      %p49 = scmp.eq.s32.totalorder %s16, 1
      %p50 = scmp.ne.s32.totalorder %s45, %s47
      %p51 = scmp.eq.s32.totalorder %s16, 0
      %p52 = por %p50, %p51
      %p53 = scmp.ne.s32.totalorder %s45, %s47
      %p54 = scmp.eq.s32.totalorder %s21, 1
      %p55 = por %p53, %p54
      %p56 = scmp.ne.s32.totalorder %s47, %s48
      %p57 = scmp.eq.s32.totalorder %s21, 0
      %p58 = por %p56, %p57
      %p59 = scmp.ne.s32.totalorder %s47, %s48
      %p60 = scmp.eq.s32.totalorder %s22, 1
      %p61 = por %p59, %p60
      %p63 = scmp.ne.s32.totalorder %s48, %s62
      %p64 = scmp.eq.s32.totalorder %s22, 0
      %p65 = por %p63, %p64
      %s66 = ssub.s32 %s16, %s23
      %p67 = scmp.eq.s32.totalorder %s66, 0
      %s69 = sadd.s32 %s68, 1
      %s70 = scalar_select %p67, %s68, %s69
      %p73 = pneg %p67
      %p74 = scmp.eq.s32.totalorder %s16, 1
      %p75 = por %p73, %p74
      %p76 = scmp.ne.s32.totalorder %s68, %s71
      %p77 = scmp.eq.s32.totalorder %s16, 0
      %p78 = por %p76, %p77
      %p79 = scmp.ne.s32.totalorder %s68, %s71
      %p80 = scmp.eq.s32.totalorder %s21, 1
      %p81 = por %p79, %p80
      %p82 = scmp.ne.s32.totalorder %s71, %s72
      %p83 = scmp.eq.s32.totalorder %s21, 0
      %p84 = por %p82, %p83
      %p85 = scmp.ne.s32.totalorder %s71, %s72
      %p86 = scmp.eq.s32.totalorder %s22, 1
      %p87 = por %p85, %p86
      %p89 = scmp.ne.s32.totalorder %s72, %s88
      %p90 = scmp.eq.s32.totalorder %s22, 0
      %p91 = por %p89, %p90
      %s92 = ssub.s32 %s16, %s23
      %p93 = scmp.eq.s32.totalorder %s92, 0
      %s95 = sadd.s32 %s94, 1
      %s96 = scalar_select %p93, %s94, %s95
      %p99 = pneg %p93
      %p100 = scmp.eq.s32.totalorder %s16, 1
      %p101 = por %p99, %p100
      %p102 = scmp.ne.s32.totalorder %s94, %s97
      %p103 = scmp.eq.s32.totalorder %s16, 0
      %p104 = por %p102, %p103
      %p105 = scmp.ne.s32.totalorder %s94, %s97
      %p106 = scmp.eq.s32.totalorder %s21, 1
      %p107 = por %p105, %p106
      %p108 = scmp.ne.s32.totalorder %s97, %s98
      %p109 = scmp.eq.s32.totalorder %s21, 0
      %p110 = por %p108, %p109
      %p111 = scmp.ne.s32.totalorder %s97, %s98
      %p112 = scmp.eq.s32.totalorder %s22, 1
      %p113 = por %p111, %p112
      %p115 = scmp.ne.s32.totalorder %s98, %s114
      %p116 = scmp.eq.s32.totalorder %s22, 0
      %p117 = por %p115, %p116
      %s118 = ssub.s32 %s16, %s23
      %p119 = scmp.eq.s32.totalorder %s118, 0
      %s121 = sadd.s32 %s120, 1
      %s122 = scalar_select %p119, %s120, %s121
      %p125 = pneg %p119
      %p126 = scmp.eq.s32.totalorder %s16, 1
      %p127 = por %p125, %p126
      %p128 = scmp.ne.s32.totalorder %s120, %s123
      %p129 = scmp.eq.s32.totalorder %s16, 0
      %p130 = por %p128, %p129
      %p131 = scmp.ne.s32.totalorder %s120, %s123
      %p132 = scmp.eq.s32.totalorder %s21, 1
      %p133 = por %p131, %p132
      %p134 = scmp.ne.s32.totalorder %s123, %s124
      %p135 = scmp.eq.s32.totalorder %s21, 0
      %p136 = por %p134, %p135
      %p137 = scmp.ne.s32.totalorder %s123, %s124
      %p138 = scmp.eq.s32.totalorder %s22, 1
      %p139 = por %p137, %p138
      %p141 = scmp.ne.s32.totalorder %s124, %s140
      %p142 = scmp.eq.s32.totalorder %s22, 0
      %p143 = por %p141, %p142
      %p144 = scmp.le.s32.totalorder 1, %s16
      %p145 = scmp.lt.s32.totalorder %s16, 3
      %p146 = pnand %p144, %p145
      %p147 = pneg %p146
      // Predicated region
      $region9: #{reconstruction_loss.1} parent=5 // pred_check
        _
      $region10: #{reconstruction_loss.1} parent=5 // pred_check_branch
        %149 = sbr.rel (%p146) target = $region12
      $region11: #{reconstruction_loss.1} parent=5 // pred_region
        %s150 = ssub.s32 %s16, 1
        // Predicated region
        $region13: #{reconstruction_loss.1} parent=11 // pred_check
          %p151 = pneg %p37
        $region14: #{reconstruction_loss.1} parent=11 // pred_check_branch
          %153 = sbr.rel (%p151) target = $region16
        $region15: #{reconstruction_loss.1} parent=11 // pred_region
          _
        $region16: #{reconstruction_loss.1} parent=11 // pred_fallthru
          _
        // Predicated region
        $region17: #{reconstruction_loss.1} parent=11 // pred_check
          %p154 = pneg %p58
        $region18: #{reconstruction_loss.1} parent=11 // pred_check_branch
          %156 = sbr.rel (%p154) target = $region20
        $region19: #{reconstruction_loss.1} parent=11 // pred_region
          _
        $region20: #{reconstruction_loss.1} parent=11 // pred_fallthru
          _
      $region12: #{reconstruction_loss.1} parent=5 // pred_fallthru
        _
      %p157 = scmp.lt.s32.totalorder %s16, 2
      // Predicated region
      $region21: #{reconstruction_loss.1} parent=5 // pred_check
        %p158 = pneg %p157
      $region22: #{reconstruction_loss.1} parent=5 // pred_check_branch
        %160 = sbr.rel (%p158) target = $region24
      $region23: #{reconstruction_loss.1} parent=5 // pred_region
        // Predicated region
        $region25: #{reconstruction_loss.1} parent=23 // pred_check
          %p161 = pneg %p78
        $region26: #{reconstruction_loss.1} parent=23 // pred_check_branch
          %163 = sbr.rel (%p161) target = $region28
        $region27: #{reconstruction_loss.1} parent=23 // pred_region
          %s164 = sand.u32 %s68, 1
          %s165 = scalar_lea.sflag [#allocation3], %s164
          %s166 = sand.u32 %s68, 1
          %s167 = smul.addr %s166, 64
          %s168 = scalar_lea.vmem [#allocation2], %s167
          %s169 = smul.u32 4, %s16
          %s171 = ssub.s32 1024, 1024
          %172 = vsyncadd %s165, %s171
          %s173 = smul.addr %s169, 2
          %s174 = smul.addr %s173, 128
          %s175 = scalar_lea.hbm %s2, %s174
          %s176 = sshll.u32 %s168, 4
          %s177 = int_to_ptr.vmem [resolvable:$true] %s176
          %182 = dma.hbm_to_vmem [thread:$0]  %s175, 1024, %s177, %s165, 128, 128, 8
        $region28: #{reconstruction_loss.1} parent=23 // pred_fallthru
          _
        // Predicated region
        $region29: #{reconstruction_loss.1} parent=23 // pred_check
          %p183 = pneg %p104
        $region30: #{reconstruction_loss.1} parent=23 // pred_check_branch
          %185 = sbr.rel (%p183) target = $region32
        $region31: #{reconstruction_loss.1} parent=23 // pred_region
          %s186 = sand.u32 %s94, 1
          %s187 = scalar_lea.sflag [#allocation5], %s186
          %s188 = sand.u32 %s94, 1
          %s189 = smul.addr %s188, 64
          %s190 = scalar_lea.vmem [#allocation4], %s189
          %s191 = smul.u32 4, %s16
          %s193 = ssub.s32 1024, 1024
          %194 = vsyncadd %s187, %s193
          %s195 = smul.addr %s191, 2
          %s196 = smul.addr %s195, 128
          %s197 = scalar_lea.hbm %s3, %s196
          %s198 = sshll.u32 %s190, 4
          %s199 = int_to_ptr.vmem [resolvable:$true] %s198
          %204 = dma.hbm_to_vmem [thread:$0]  %s197, 1024, %s199, %s187, 128, 128, 8
        $region32: #{reconstruction_loss.1} parent=23 // pred_fallthru
          _
      $region24: #{reconstruction_loss.1} parent=5 // pred_fallthru
        _
      %p205 = scmp.le.s32.totalorder 1, %s16
      %p206 = scmp.lt.s32.totalorder %s16, 3
      %p207 = pnand %p205, %p206
      %p208 = pneg %p207
      // Predicated region
      $region33: #{reconstruction_loss.1} parent=5 // pred_check
        _
      $region34: #{reconstruction_loss.1} parent=5 // pred_check_branch
        %210 = sbr.rel (%p207) target = $region36
      $region35: #{reconstruction_loss.1} parent=5 // pred_region
        %s211 = ssub.s32 %s16, 1
        %s212 = sand.u32 %s71, 1
        %s213 = scalar_lea.sflag [#allocation3], %s212
        %s214 = sand.u32 %s71, 1
        %s215 = smul.addr %s214, 64
        %s216 = scalar_lea.vmem [#allocation2], %s215
        // Predicated region
        $region37: #{reconstruction_loss.1} parent=35 // pred_check
          %p217 = pneg %p84
        $region38: #{reconstruction_loss.1} parent=35 // pred_check_branch
          %219 = sbr.rel (%p217) target = $region40
        $region39: #{reconstruction_loss.1} parent=35 // pred_region
          %220 = dma.done %s213, 1024
        $region40: #{reconstruction_loss.1} parent=35 // pred_fallthru
          _
        %s221 = sand.u32 %s97, 1
        %s222 = scalar_lea.sflag [#allocation5], %s221
        %s223 = sand.u32 %s97, 1
        %s224 = smul.addr %s223, 64
        %s225 = scalar_lea.vmem [#allocation4], %s224
        // Predicated region
        $region41: #{reconstruction_loss.1} parent=35 // pred_check
          %p226 = pneg %p110
        $region42: #{reconstruction_loss.1} parent=35 // pred_check_branch
          %228 = sbr.rel (%p226) target = $region44
        $region43: #{reconstruction_loss.1} parent=35 // pred_region
          %229 = dma.done %s222, 1024
        $region44: #{reconstruction_loss.1} parent=35 // pred_fallthru
          _
        %p230 = pneg %p37
        %p231 = pneg %p34
        %p232 = pneg %p58
        %p233 = pneg %p55
        %s234 = sand.u32 %s71, 1
        %s235 = scalar_lea.sflag [#allocation3], %s234
        %s236 = sand.u32 %s71, 1
        %s237 = smul.addr %s236, 64
        %s238 = scalar_lea.vmem [#allocation2], %s237
        %p239 = pneg %p84
        %p240 = pneg %p81
        %s241 = sand.u32 %s97, 1
        %s242 = scalar_lea.sflag [#allocation5], %s241
        %s243 = sand.u32 %s97, 1
        %s244 = smul.addr %s243, 64
        %s245 = scalar_lea.vmem [#allocation4], %s244
        %p246 = pneg %p110
        %p247 = pneg %p107
        %p248 = pneg %p136
        %p249 = pneg %p133
        %p250 = scmp.lt.s32.totalorder %s21, 1
        %s251 = scalar_select %p250, %s21, 1
        %s252 = smul.addr %s251, 8
        %s253 = scalar_lea.vmem %s4, %s252
        %s254 = smul.u32 4, %s21
        %s255 = smul.u32 4, %s21
        %p256 = scmp.lt.s32.totalorder %s21, 1
        %s257 = scalar_select %p256, %s21, 1
        %s258 = smul.addr %s257, 8
        %s259 = scalar_lea.vmem %s4, %s258
        %v260 = vld [vmem:[%s216] sm:$0xff]
        %v261 = vld [vmem:[%s216 + $0x8] sm:$0xff]
        %v262 = vld [vmem:[%s216 + $0x10] sm:$0xff]
        %v263 = vld [vmem:[%s216 + $0x18] sm:$0xff]
        %v264 = vld [vmem:[%s216 + $0x20] sm:$0xff]
        %v265 = vld [vmem:[%s216 + $0x28] sm:$0xff]
        %v266 = vld [vmem:[%s216 + $0x30] sm:$0xff]
        %v267 = vld [vmem:[%s216 + $0x38] sm:$0xff]
        %v268 = vld [vmem:[%s225] sm:$0xff]
        %v269 = vld [vmem:[%s225 + $0x8] sm:$0xff]
        %v270 = vld [vmem:[%s225 + $0x10] sm:$0xff]
        %v271 = vld [vmem:[%s225 + $0x18] sm:$0xff]
        %v272 = vld [vmem:[%s225 + $0x20] sm:$0xff]
        %v273 = vld [vmem:[%s225 + $0x28] sm:$0xff]
        %v274 = vld [vmem:[%s225 + $0x30] sm:$0xff]
        %v275 = vld [vmem:[%s225 + $0x38] sm:$0xff]
        %v276 = vld [vmem:[%s0] sm:$0xff]
        %v277 = vld [vmem:[%s0 + $0x8] sm:$0xff]
        %v278 = vld [vmem:[%s1] sm:$0xff]
        %v279 = vld [vmem:[%s1 + $0x8] sm:$0xff]
        %v280 = vmul.f32 %v260, %v260
        %v281 = vmul.f32 %v261, %v261
        %v282 = vmul.f32 %v262, %v262
        %v283 = vmul.f32 %v263, %v263
        %v284 = vmul.f32 %v264, %v264
        %v285 = vmul.f32 %v265, %v265
        %v286 = vmul.f32 %v266, %v266
        %v287 = vmul.f32 %v267, %v267
        %v288 = vmul.f32 %v268, %v268
        %v289 = vmul.f32 %v269, %v269
        %v290 = vmul.f32 %v270, %v270
        %v291 = vmul.f32 %v271, %v271
        %v292 = vmul.f32 %v272, %v272
        %v293 = vmul.f32 %v273, %v273
        %v294 = vmul.f32 %v274, %v274
        %v295 = vmul.f32 %v275, %v275
        %v296 = vmul.f32 %v260, %v268
        %v297 = vmul.f32 %v261, %v269
        %v298 = vmul.f32 %v262, %v270
        %v299 = vmul.f32 %v263, %v271
        %v300 = vmul.f32 %v264, %v272
        %v301 = vmul.f32 %v265, %v273
        %v302 = vmul.f32 %v266, %v274
        %v303 = vmul.f32 %v267, %v275
        %vm304 = vcmask 130048
        %v306 = vsel %vm304, %v276, 0
        %v309 = vsel %vm304, %v277, 0
        %311 = vmatprep.subr.mxu0 0.0
        %312 = vmatpush1.msra.mxu0 %v260
        %313 = vmatprep.subr.mxu0 0.0
        %314 = vmatpush1.msra.mxu0 %v261
        %315 = vmatprep.subr.mxu0 0.0
        %316 = vmatpush1.msra.mxu0 0.0
        %317 = vmatprep.subr.mxu0 0.0
        %318 = vmatpush1.msra.mxu0 0.0
        %319 = vmatprep.subr.mxu0 0.0
        %320 = vmatpush1.msra.mxu0 0.0
        %321 = vmatprep.subr.mxu0 0.0
        %322 = vmatpush1.msra.mxu0 0.0
        %323 = vmatprep.subr.mxu0 0.0
        %324 = vmatpush1.msra.mxu0 0.0
        %325 = vmatprep.subr.mxu0 0.0
        %326 = vmatpush1.msra.mxu0 0.0
        %327 = vmatprep.subr.mxu0 0.0
        %328 = vmatpush1.msra.mxu0 0.0
        %329 = vmatprep.subr.mxu0 0.0
        %330 = vmatpush1.msra.mxu0 0.0
        %331 = vmatprep.subr.mxu0 0.0
        %332 = vmatpush1.msra.mxu0 0.0
        %333 = vmatprep.subr.mxu0 0.0
        %334 = vmatpush1.msra.mxu0 0.0
        %335 = vmatprep.subr.mxu0 0.0
        %336 = vmatpush1.msra.mxu0 0.0
        %337 = vmatprep.subr.mxu0 0.0
        %338 = vmatpush1.msra.mxu0 0.0
        %339 = vmatprep.subr.mxu0 0.0
        %340 = vmatpush1.msra.mxu0 0.0
        %341 = vmatprep.subr.mxu0 0.0
        %342 = vmatpush1.msra.mxu0 0.0
        %343 = vmatprep.subr.mxu0 0.0
        %344 = vmatpush1.msra.mxu0 0.0
        %345 = vmatprep.subr.mxu0 0.0
        %346 = vmatpush1.msra.mxu0 0.0
        %347 = vmatprep.subr.mxu0 0.0
        %348 = vmatpush1.msra.mxu0 0.0
        %349 = vmatprep.subr.mxu0 0.0
        %350 = vmatpush1.msra.mxu0 0.0
        %351 = vmatprep.subr.mxu0 0.0
        %352 = vmatpush1.msra.mxu0 0.0
        %353 = vmatprep.subr.mxu0 0.0
        %354 = vmatpush1.msra.mxu0 0.0
        %355 = vmatprep.subr.mxu0 0.0
        %356 = vmatpush1.msra.mxu0 0.0
        %357 = vmatprep.subr.mxu0 0.0
        %358 = vmatpush1.msra.mxu0 0.0
        %359 = vmatprep.subr.mxu0 0.0
        %360 = vmatpush1.msra.mxu0 0.0
        %361 = vmatprep.subr.mxu0 0.0
        %362 = vmatpush1.msra.mxu0 0.0
        %363 = vmatprep.subr.mxu0 0.0
        %364 = vmatpush1.msra.mxu0 0.0
        %365 = vmatprep.subr.mxu0 0.0
        %366 = vmatpush1.msra.mxu0 0.0
        %367 = vmatprep.subr.mxu0 0.0
        %368 = vmatpush1.msra.mxu0 0.0
        %369 = vmatprep.subr.mxu0 0.0
        %370 = vmatpush1.msra.mxu0 0.0
        %371 = vmatprep.subr.mxu0 0.0
        %372 = vmatpush1.msra.mxu0 0.0
        %373 = vmatprep.subr.mxu0 0.0
        %374 = vmatpush1.msra.mxu0 0.0
        %375 = vmatprep.mubr.f32.mxu0 0.0
        %376 = vmatmul.mubr.f32.gmra.mrb[0].mxu0 %v306
        %v377 = vpop.f32.mrb[0].mxu0
        %v378 = vadd.f32 0.0, %v377
        %v379 = vpop.f32.mrb[0].mxu0
        %380 = vmatprep.mubr.f32.mxu0 0.0
        %381 = vmatmul.mubr.f32.gmra.mrb[0].mxu0 %v309
        %v382 = vpop.f32.mrb[0].mxu0
        %v383 = vadd.f32 0.0, %v382
        %v384 = vpop.f32.mrb[0].mxu0
        %385 = vdwg.mxu0
        %386 = vmatprep.subr.mxu0 0.0
        %387 = vmatpush1.msra.mxu0 %v262
        %388 = vmatprep.subr.mxu0 0.0
        %389 = vmatpush1.msra.mxu0 %v263
        %390 = vmatprep.subr.mxu0 0.0
        %391 = vmatpush1.msra.mxu0 0.0
        %392 = vmatprep.subr.mxu0 0.0
        %393 = vmatpush1.msra.mxu0 0.0
        %394 = vmatprep.subr.mxu0 0.0
        %395 = vmatpush1.msra.mxu0 0.0
        %396 = vmatprep.subr.mxu0 0.0
        %397 = vmatpush1.msra.mxu0 0.0
        %398 = vmatprep.subr.mxu0 0.0
        %399 = vmatpush1.msra.mxu0 0.0
        %400 = vmatprep.subr.mxu0 0.0
        %401 = vmatpush1.msra.mxu0 0.0
        %402 = vmatprep.subr.mxu0 0.0
        %403 = vmatpush1.msra.mxu0 0.0
        %404 = vmatprep.subr.mxu0 0.0
        %405 = vmatpush1.msra.mxu0 0.0
        %406 = vmatprep.subr.mxu0 0.0
        %407 = vmatpush1.msra.mxu0 0.0
        %408 = vmatprep.subr.mxu0 0.0
        %409 = vmatpush1.msra.mxu0 0.0
        %410 = vmatprep.subr.mxu0 0.0
        %411 = vmatpush1.msra.mxu0 0.0
        %412 = vmatprep.subr.mxu0 0.0
        %413 = vmatpush1.msra.mxu0 0.0
        %414 = vmatprep.subr.mxu0 0.0
        %415 = vmatpush1.msra.mxu0 0.0
        %416 = vmatprep.subr.mxu0 0.0
        %417 = vmatpush1.msra.mxu0 0.0
        %418 = vmatprep.subr.mxu0 0.0
        %419 = vmatpush1.msra.mxu0 0.0
        %420 = vmatprep.subr.mxu0 0.0
        %421 = vmatpush1.msra.mxu0 0.0
        %422 = vmatprep.subr.mxu0 0.0
        %423 = vmatpush1.msra.mxu0 0.0
        %424 = vmatprep.subr.mxu0 0.0
        %425 = vmatpush1.msra.mxu0 0.0
        %426 = vmatprep.subr.mxu0 0.0
        %427 = vmatpush1.msra.mxu0 0.0
        %428 = vmatprep.subr.mxu0 0.0
        %429 = vmatpush1.msra.mxu0 0.0
        %430 = vmatprep.subr.mxu0 0.0
        %431 = vmatpush1.msra.mxu0 0.0
        %432 = vmatprep.subr.mxu0 0.0
        %433 = vmatpush1.msra.mxu0 0.0
        %434 = vmatprep.subr.mxu0 0.0
        %435 = vmatpush1.msra.mxu0 0.0
        %436 = vmatprep.subr.mxu0 0.0
        %437 = vmatpush1.msra.mxu0 0.0
        %438 = vmatprep.subr.mxu0 0.0
        %439 = vmatpush1.msra.mxu0 0.0
        %440 = vmatprep.subr.mxu0 0.0
        %441 = vmatpush1.msra.mxu0 0.0
        %442 = vmatprep.subr.mxu0 0.0
        %443 = vmatpush1.msra.mxu0 0.0
        %444 = vmatprep.subr.mxu0 0.0
        %445 = vmatpush1.msra.mxu0 0.0
        %446 = vmatprep.subr.mxu0 0.0
        %447 = vmatpush1.msra.mxu0 0.0
        %448 = vmatprep.subr.mxu0 0.0
        %449 = vmatpush1.msra.mxu0 0.0
        %450 = vmatprep.mubr.f32.mxu0 0.0
        %451 = vmatmul.mubr.f32.gmra.mrb[0].mxu0 %v306
        %v452 = vpop.f32.mrb[0].mxu0
        %v453 = vadd.f32 0.0, %v452
        %v454 = vpop.f32.mrb[0].mxu0
        %455 = vmatprep.mubr.f32.mxu0 0.0
        %456 = vmatmul.mubr.f32.gmra.mrb[0].mxu0 %v309
        %v457 = vpop.f32.mrb[0].mxu0
        %v458 = vadd.f32 0.0, %v457
        %v459 = vpop.f32.mrb[0].mxu0
        %460 = vdwg.mxu0
        %461 = vmatprep.subr.mxu0 0.0
        %462 = vmatpush1.msra.mxu0 %v264
        %463 = vmatprep.subr.mxu0 0.0
        %464 = vmatpush1.msra.mxu0 %v265
        %465 = vmatprep.subr.mxu0 0.0
        %466 = vmatpush1.msra.mxu0 0.0
        %467 = vmatprep.subr.mxu0 0.0
        %468 = vmatpush1.msra.mxu0 0.0
        %469 = vmatprep.subr.mxu0 0.0
        %470 = vmatpush1.msra.mxu0 0.0
        %471 = vmatprep.subr.mxu0 0.0
        %472 = vmatpush1.msra.mxu0 0.0
        %473 = vmatprep.subr.mxu0 0.0
        %474 = vmatpush1.msra.mxu0 0.0
        %475 = vmatprep.subr.mxu0 0.0
        %476 = vmatpush1.msra.mxu0 0.0
        %477 = vmatprep.subr.mxu0 0.0
        %478 = vmatpush1.msra.mxu0 0.0
        %479 = vmatprep.subr.mxu0 0.0
        %480 = vmatpush1.msra.mxu0 0.0
        %481 = vmatprep.subr.mxu0 0.0
        %482 = vmatpush1.msra.mxu0 0.0
        %483 = vmatprep.subr.mxu0 0.0
        %484 = vmatpush1.msra.mxu0 0.0
        %485 = vmatprep.subr.mxu0 0.0
        %486 = vmatpush1.msra.mxu0 0.0
        %487 = vmatprep.subr.mxu0 0.0
        %488 = vmatpush1.msra.mxu0 0.0
        %489 = vmatprep.subr.mxu0 0.0
        %490 = vmatpush1.msra.mxu0 0.0
        %491 = vmatprep.subr.mxu0 0.0
        %492 = vmatpush1.msra.mxu0 0.0
        %493 = vmatprep.subr.mxu0 0.0
        %494 = vmatpush1.msra.mxu0 0.0
        %495 = vmatprep.subr.mxu0 0.0
        %496 = vmatpush1.msra.mxu0 0.0
        %497 = vmatprep.subr.mxu0 0.0
        %498 = vmatpush1.msra.mxu0 0.0
        %499 = vmatprep.subr.mxu0 0.0
        %500 = vmatpush1.msra.mxu0 0.0
        %501 = vmatprep.subr.mxu0 0.0
        %502 = vmatpush1.msra.mxu0 0.0
        %503 = vmatprep.subr.mxu0 0.0
        %504 = vmatpush1.msra.mxu0 0.0
        %505 = vmatprep.subr.mxu0 0.0
        %506 = vmatpush1.msra.mxu0 0.0
        %507 = vmatprep.subr.mxu0 0.0
        %508 = vmatpush1.msra.mxu0 0.0
        %509 = vmatprep.subr.mxu0 0.0
        %510 = vmatpush1.msra.mxu0 0.0
        %511 = vmatprep.subr.mxu0 0.0
        %512 = vmatpush1.msra.mxu0 0.0
        %513 = vmatprep.subr.mxu0 0.0
        %514 = vmatpush1.msra.mxu0 0.0
        %515 = vmatprep.subr.mxu0 0.0
        %516 = vmatpush1.msra.mxu0 0.0
        %517 = vmatprep.subr.mxu0 0.0
        %518 = vmatpush1.msra.mxu0 0.0
        %519 = vmatprep.subr.mxu0 0.0
        %520 = vmatpush1.msra.mxu0 0.0
        %521 = vmatprep.subr.mxu0 0.0
        %522 = vmatpush1.msra.mxu0 0.0
        %523 = vmatprep.subr.mxu0 0.0
        %524 = vmatpush1.msra.mxu0 0.0
        %525 = vmatprep.mubr.f32.mxu0 0.0
        %526 = vmatmul.mubr.f32.gmra.mrb[0].mxu0 %v306
        %v527 = vpop.f32.mrb[0].mxu0
        %v528 = vadd.f32 0.0, %v527
        %v529 = vpop.f32.mrb[0].mxu0
        %530 = vmatprep.mubr.f32.mxu0 0.0
        %531 = vmatmul.mubr.f32.gmra.mrb[0].mxu0 %v309
        %v532 = vpop.f32.mrb[0].mxu0
        %v533 = vadd.f32 0.0, %v532
        %v534 = vpop.f32.mrb[0].mxu0
        %535 = vdwg.mxu0
        %536 = vmatprep.subr.mxu0 0.0
        %537 = vmatpush1.msra.mxu0 %v266
        %538 = vmatprep.subr.mxu0 0.0
        %539 = vmatpush1.msra.mxu0 %v267
        %540 = vmatprep.subr.mxu0 0.0
        %541 = vmatpush1.msra.mxu0 0.0
        %542 = vmatprep.subr.mxu0 0.0
        %543 = vmatpush1.msra.mxu0 0.0
        %544 = vmatprep.subr.mxu0 0.0
        %545 = vmatpush1.msra.mxu0 0.0
        %546 = vmatprep.subr.mxu0 0.0
        %547 = vmatpush1.msra.mxu0 0.0
        %548 = vmatprep.subr.mxu0 0.0
        %549 = vmatpush1.msra.mxu0 0.0
        %550 = vmatprep.subr.mxu0 0.0
        %551 = vmatpush1.msra.mxu0 0.0
        %552 = vmatprep.subr.mxu0 0.0
        %553 = vmatpush1.msra.mxu0 0.0
        %554 = vmatprep.subr.mxu0 0.0
        %555 = vmatpush1.msra.mxu0 0.0
        %556 = vmatprep.subr.mxu0 0.0
        %557 = vmatpush1.msra.mxu0 0.0
        %558 = vmatprep.subr.mxu0 0.0
        %559 = vmatpush1.msra.mxu0 0.0
        %560 = vmatprep.subr.mxu0 0.0
        %561 = vmatpush1.msra.mxu0 0.0
        %562 = vmatprep.subr.mxu0 0.0
        %563 = vmatpush1.msra.mxu0 0.0
        %564 = vmatprep.subr.mxu0 0.0
        %565 = vmatpush1.msra.mxu0 0.0
        %566 = vmatprep.subr.mxu0 0.0
        %567 = vmatpush1.msra.mxu0 0.0
        %568 = vmatprep.subr.mxu0 0.0
        %569 = vmatpush1.msra.mxu0 0.0
        %570 = vmatprep.subr.mxu0 0.0
        %571 = vmatpush1.msra.mxu0 0.0
        %572 = vmatprep.subr.mxu0 0.0
        %573 = vmatpush1.msra.mxu0 0.0
        %574 = vmatprep.subr.mxu0 0.0
        %575 = vmatpush1.msra.mxu0 0.0
        %576 = vmatprep.subr.mxu0 0.0
        %577 = vmatpush1.msra.mxu0 0.0
        %578 = vmatprep.subr.mxu0 0.0
        %579 = vmatpush1.msra.mxu0 0.0
        %580 = vmatprep.subr.mxu0 0.0
        %581 = vmatpush1.msra.mxu0 0.0
        %582 = vmatprep.subr.mxu0 0.0
        %583 = vmatpush1.msra.mxu0 0.0
        %584 = vmatprep.subr.mxu0 0.0
        %585 = vmatpush1.msra.mxu0 0.0
        %586 = vmatprep.subr.mxu0 0.0
        %587 = vmatpush1.msra.mxu0 0.0
        %588 = vmatprep.subr.mxu0 0.0
        %589 = vmatpush1.msra.mxu0 0.0
        %590 = vmatprep.subr.mxu0 0.0
        %591 = vmatpush1.msra.mxu0 0.0
        %592 = vmatprep.subr.mxu0 0.0
        %593 = vmatpush1.msra.mxu0 0.0
        %594 = vmatprep.subr.mxu0 0.0
        %595 = vmatpush1.msra.mxu0 0.0
        %596 = vmatprep.subr.mxu0 0.0
        %597 = vmatpush1.msra.mxu0 0.0
        %598 = vmatprep.subr.mxu0 0.0
        %599 = vmatpush1.msra.mxu0 0.0
        %600 = vmatprep.mubr.f32.mxu0 0.0
        %601 = vmatmul.mubr.f32.gmra.mrb[0].mxu0 %v306
        %v602 = vpop.f32.mrb[0].mxu0
        %v603 = vadd.f32 0.0, %v602
        %v604 = vpop.f32.mrb[0].mxu0
        %605 = vmatprep.mubr.f32.mxu0 0.0
        %606 = vmatmul.mubr.f32.gmra.mrb[0].mxu0 %v309
        %v607 = vpop.f32.mrb[0].mxu0
        %v608 = vadd.f32 0.0, %v607
        %v609 = vpop.f32.mrb[0].mxu0
        %610 = vdwg.mxu0
        %611 = vmatprep.subr.mxu0 0.0
        %612 = vmatpush1.msra.mxu0 %v268
        %613 = vmatprep.subr.mxu0 0.0
        %614 = vmatpush1.msra.mxu0 %v269
        %615 = vmatprep.subr.mxu0 0.0
        %616 = vmatpush1.msra.mxu0 0.0
        %617 = vmatprep.subr.mxu0 0.0
        %618 = vmatpush1.msra.mxu0 0.0
        %619 = vmatprep.subr.mxu0 0.0
        %620 = vmatpush1.msra.mxu0 0.0
        %621 = vmatprep.subr.mxu0 0.0
        %622 = vmatpush1.msra.mxu0 0.0
        %623 = vmatprep.subr.mxu0 0.0
        %624 = vmatpush1.msra.mxu0 0.0
        %625 = vmatprep.subr.mxu0 0.0
        %626 = vmatpush1.msra.mxu0 0.0
        %627 = vmatprep.subr.mxu0 0.0
        %628 = vmatpush1.msra.mxu0 0.0
        %629 = vmatprep.subr.mxu0 0.0
        %630 = vmatpush1.msra.mxu0 0.0
        %631 = vmatprep.subr.mxu0 0.0
        %632 = vmatpush1.msra.mxu0 0.0
        %633 = vmatprep.subr.mxu0 0.0
        %634 = vmatpush1.msra.mxu0 0.0
        %635 = vmatprep.subr.mxu0 0.0
        %636 = vmatpush1.msra.mxu0 0.0
        %637 = vmatprep.subr.mxu0 0.0
        %638 = vmatpush1.msra.mxu0 0.0
        %639 = vmatprep.subr.mxu0 0.0
        %640 = vmatpush1.msra.mxu0 0.0
        %641 = vmatprep.subr.mxu0 0.0
        %642 = vmatpush1.msra.mxu0 0.0
        %643 = vmatprep.subr.mxu0 0.0
        %644 = vmatpush1.msra.mxu0 0.0
        %645 = vmatprep.subr.mxu0 0.0
        %646 = vmatpush1.msra.mxu0 0.0
        %647 = vmatprep.subr.mxu0 0.0
        %648 = vmatpush1.msra.mxu0 0.0
        %649 = vmatprep.subr.mxu0 0.0
        %650 = vmatpush1.msra.mxu0 0.0
        %651 = vmatprep.subr.mxu0 0.0
        %652 = vmatpush1.msra.mxu0 0.0
        %653 = vmatprep.subr.mxu0 0.0
        %654 = vmatpush1.msra.mxu0 0.0
        %655 = vmatprep.subr.mxu0 0.0
        %656 = vmatpush1.msra.mxu0 0.0
        %657 = vmatprep.subr.mxu0 0.0
        %658 = vmatpush1.msra.mxu0 0.0
        %659 = vmatprep.subr.mxu0 0.0
        %660 = vmatpush1.msra.mxu0 0.0
        %661 = vmatprep.subr.mxu0 0.0
        %662 = vmatpush1.msra.mxu0 0.0
        %663 = vmatprep.subr.mxu0 0.0
        %664 = vmatpush1.msra.mxu0 0.0
        %665 = vmatprep.subr.mxu0 0.0
        %666 = vmatpush1.msra.mxu0 0.0
        %667 = vmatprep.subr.mxu0 0.0
        %668 = vmatpush1.msra.mxu0 0.0
        %669 = vmatprep.subr.mxu0 0.0
        %670 = vmatpush1.msra.mxu0 0.0
        %671 = vmatprep.subr.mxu0 0.0
        %672 = vmatpush1.msra.mxu0 0.0
        %673 = vmatprep.subr.mxu0 0.0
        %674 = vmatpush1.msra.mxu0 0.0
        %675 = vmatprep.mubr.f32.mxu0 0.0
        %676 = vmatmul.mubr.f32.gmra.mrb[0].mxu0 %v306
        %v677 = vpop.f32.mrb[0].mxu0
        %v678 = vadd.f32 0.0, %v677
        %v679 = vpop.f32.mrb[0].mxu0
        %680 = vmatprep.mubr.f32.mxu0 0.0
        %681 = vmatmul.mubr.f32.gmra.mrb[0].mxu0 %v309
        %v682 = vpop.f32.mrb[0].mxu0
        %v683 = vadd.f32 0.0, %v682
        %v684 = vpop.f32.mrb[0].mxu0
        %685 = vdwg.mxu0
        %686 = vmatprep.subr.mxu0 0.0
        %687 = vmatpush1.msra.mxu0 %v270
        %688 = vmatprep.subr.mxu0 0.0
        %689 = vmatpush1.msra.mxu0 %v271
        %690 = vmatprep.subr.mxu0 0.0
        %691 = vmatpush1.msra.mxu0 0.0
        %692 = vmatprep.subr.mxu0 0.0
        %693 = vmatpush1.msra.mxu0 0.0
        %694 = vmatprep.subr.mxu0 0.0
        %695 = vmatpush1.msra.mxu0 0.0
        %696 = vmatprep.subr.mxu0 0.0
        %697 = vmatpush1.msra.mxu0 0.0
        %698 = vmatprep.subr.mxu0 0.0
        %699 = vmatpush1.msra.mxu0 0.0
        %700 = vmatprep.subr.mxu0 0.0
        %701 = vmatpush1.msra.mxu0 0.0
        %702 = vmatprep.subr.mxu0 0.0
        %703 = vmatpush1.msra.mxu0 0.0
        %704 = vmatprep.subr.mxu0 0.0
        %705 = vmatpush1.msra.mxu0 0.0
        %706 = vmatprep.subr.mxu0 0.0
        %707 = vmatpush1.msra.mxu0 0.0
        %708 = vmatprep.subr.mxu0 0.0
        %709 = vmatpush1.msra.mxu0 0.0
        %710 = vmatprep.subr.mxu0 0.0
        %711 = vmatpush1.msra.mxu0 0.0
        %712 = vmatprep.subr.mxu0 0.0
        %713 = vmatpush1.msra.mxu0 0.0
        %714 = vmatprep.subr.mxu0 0.0
        %715 = vmatpush1.msra.mxu0 0.0
        %716 = vmatprep.subr.mxu0 0.0
        %717 = vmatpush1.msra.mxu0 0.0
        %718 = vmatprep.subr.mxu0 0.0
        %719 = vmatpush1.msra.mxu0 0.0
        %720 = vmatprep.subr.mxu0 0.0
        %721 = vmatpush1.msra.mxu0 0.0
        %722 = vmatprep.subr.mxu0 0.0
        %723 = vmatpush1.msra.mxu0 0.0
        %724 = vmatprep.subr.mxu0 0.0
        %725 = vmatpush1.msra.mxu0 0.0
        %726 = vmatprep.subr.mxu0 0.0
        %727 = vmatpush1.msra.mxu0 0.0
        %728 = vmatprep.subr.mxu0 0.0
        %729 = vmatpush1.msra.mxu0 0.0
        %730 = vmatprep.subr.mxu0 0.0
        %731 = vmatpush1.msra.mxu0 0.0
        %732 = vmatprep.subr.mxu0 0.0
        %733 = vmatpush1.msra.mxu0 0.0
        %734 = vmatprep.subr.mxu0 0.0
        %735 = vmatpush1.msra.mxu0 0.0
        %736 = vmatprep.subr.mxu0 0.0
        %737 = vmatpush1.msra.mxu0 0.0
        %738 = vmatprep.subr.mxu0 0.0
        %739 = vmatpush1.msra.mxu0 0.0
        %740 = vmatprep.subr.mxu0 0.0
        %741 = vmatpush1.msra.mxu0 0.0
        %742 = vmatprep.subr.mxu0 0.0
        %743 = vmatpush1.msra.mxu0 0.0
        %744 = vmatprep.subr.mxu0 0.0
        %745 = vmatpush1.msra.mxu0 0.0
        %746 = vmatprep.subr.mxu0 0.0
        %747 = vmatpush1.msra.mxu0 0.0
        %748 = vmatprep.subr.mxu0 0.0
        %749 = vmatpush1.msra.mxu0 0.0
        %750 = vmatprep.mubr.f32.mxu0 0.0
        %751 = vmatmul.mubr.f32.gmra.mrb[0].mxu0 %v306
        %v752 = vpop.f32.mrb[0].mxu0
        %v753 = vadd.f32 0.0, %v752
        %v754 = vpop.f32.mrb[0].mxu0
        %755 = vmatprep.mubr.f32.mxu0 0.0
        %756 = vmatmul.mubr.f32.gmra.mrb[0].mxu0 %v309
        %v757 = vpop.f32.mrb[0].mxu0
        %v758 = vadd.f32 0.0, %v757
        %v759 = vpop.f32.mrb[0].mxu0
        %760 = vdwg.mxu0
        %761 = vmatprep.subr.mxu0 0.0
        %762 = vmatpush1.msra.mxu0 %v272
        %763 = vmatprep.subr.mxu0 0.0
        %764 = vmatpush1.msra.mxu0 %v273
        %765 = vmatprep.subr.mxu0 0.0
        %766 = vmatpush1.msra.mxu0 0.0
        %767 = vmatprep.subr.mxu0 0.0
        %768 = vmatpush1.msra.mxu0 0.0
        %769 = vmatprep.subr.mxu0 0.0
        %770 = vmatpush1.msra.mxu0 0.0
        %771 = vmatprep.subr.mxu0 0.0
        %772 = vmatpush1.msra.mxu0 0.0
        %773 = vmatprep.subr.mxu0 0.0
        %774 = vmatpush1.msra.mxu0 0.0
        %775 = vmatprep.subr.mxu0 0.0
        %776 = vmatpush1.msra.mxu0 0.0
        %777 = vmatprep.subr.mxu0 0.0
        %778 = vmatpush1.msra.mxu0 0.0
        %779 = vmatprep.subr.mxu0 0.0
        %780 = vmatpush1.msra.mxu0 0.0
        %781 = vmatprep.subr.mxu0 0.0
        %782 = vmatpush1.msra.mxu0 0.0
        %783 = vmatprep.subr.mxu0 0.0
        %784 = vmatpush1.msra.mxu0 0.0
        %785 = vmatprep.subr.mxu0 0.0
        %786 = vmatpush1.msra.mxu0 0.0
        %787 = vmatprep.subr.mxu0 0.0
        %788 = vmatpush1.msra.mxu0 0.0
        %789 = vmatprep.subr.mxu0 0.0
        %790 = vmatpush1.msra.mxu0 0.0
        %791 = vmatprep.subr.mxu0 0.0
        %792 = vmatpush1.msra.mxu0 0.0
        %793 = vmatprep.subr.mxu0 0.0
        %794 = vmatpush1.msra.mxu0 0.0
        %795 = vmatprep.subr.mxu0 0.0
        %796 = vmatpush1.msra.mxu0 0.0
        %797 = vmatprep.subr.mxu0 0.0
        %798 = vmatpush1.msra.mxu0 0.0
        %799 = vmatprep.subr.mxu0 0.0
        %800 = vmatpush1.msra.mxu0 0.0
        %801 = vmatprep.subr.mxu0 0.0
        %802 = vmatpush1.msra.mxu0 0.0
        %803 = vmatprep.subr.mxu0 0.0
        %804 = vmatpush1.msra.mxu0 0.0
        %805 = vmatprep.subr.mxu0 0.0
        %806 = vmatpush1.msra.mxu0 0.0
        %807 = vmatprep.subr.mxu0 0.0
        %808 = vmatpush1.msra.mxu0 0.0
        %809 = vmatprep.subr.mxu0 0.0
        %810 = vmatpush1.msra.mxu0 0.0
        %811 = vmatprep.subr.mxu0 0.0
        %812 = vmatpush1.msra.mxu0 0.0
        %813 = vmatprep.subr.mxu0 0.0
        %814 = vmatpush1.msra.mxu0 0.0
        %815 = vmatprep.subr.mxu0 0.0
        %816 = vmatpush1.msra.mxu0 0.0
        %817 = vmatprep.subr.mxu0 0.0
        %818 = vmatpush1.msra.mxu0 0.0
        %819 = vmatprep.subr.mxu0 0.0
        %820 = vmatpush1.msra.mxu0 0.0
        %821 = vmatprep.subr.mxu0 0.0
        %822 = vmatpush1.msra.mxu0 0.0
        %823 = vmatprep.subr.mxu0 0.0
        %824 = vmatpush1.msra.mxu0 0.0
        %825 = vmatprep.mubr.f32.mxu0 0.0
        %826 = vmatmul.mubr.f32.gmra.mrb[0].mxu0 %v306
        %v827 = vpop.f32.mrb[0].mxu0
        %v828 = vadd.f32 0.0, %v827
        %v829 = vpop.f32.mrb[0].mxu0
        %830 = vmatprep.mubr.f32.mxu0 0.0
        %831 = vmatmul.mubr.f32.gmra.mrb[0].mxu0 %v309
        %v832 = vpop.f32.mrb[0].mxu0
        %v833 = vadd.f32 0.0, %v832
        %v834 = vpop.f32.mrb[0].mxu0
        %835 = vdwg.mxu0
        %836 = vmatprep.subr.mxu0 0.0
        %837 = vmatpush1.msra.mxu0 %v274
        %838 = vmatprep.subr.mxu0 0.0
        %839 = vmatpush1.msra.mxu0 %v275
        %840 = vmatprep.subr.mxu0 0.0
        %841 = vmatpush1.msra.mxu0 0.0
        %842 = vmatprep.subr.mxu0 0.0
        %843 = vmatpush1.msra.mxu0 0.0
        %844 = vmatprep.subr.mxu0 0.0
        %845 = vmatpush1.msra.mxu0 0.0
        %846 = vmatprep.subr.mxu0 0.0
        %847 = vmatpush1.msra.mxu0 0.0
        %848 = vmatprep.subr.mxu0 0.0
        %849 = vmatpush1.msra.mxu0 0.0
        %850 = vmatprep.subr.mxu0 0.0
        %851 = vmatpush1.msra.mxu0 0.0
        %852 = vmatprep.subr.mxu0 0.0
        %853 = vmatpush1.msra.mxu0 0.0
        %854 = vmatprep.subr.mxu0 0.0
        %855 = vmatpush1.msra.mxu0 0.0
        %856 = vmatprep.subr.mxu0 0.0
        %857 = vmatpush1.msra.mxu0 0.0
        %858 = vmatprep.subr.mxu0 0.0
        %859 = vmatpush1.msra.mxu0 0.0
        %860 = vmatprep.subr.mxu0 0.0
        %861 = vmatpush1.msra.mxu0 0.0
        %862 = vmatprep.subr.mxu0 0.0
        %863 = vmatpush1.msra.mxu0 0.0
        %864 = vmatprep.subr.mxu0 0.0
        %865 = vmatpush1.msra.mxu0 0.0
        %866 = vmatprep.subr.mxu0 0.0
        %867 = vmatpush1.msra.mxu0 0.0
        %868 = vmatprep.subr.mxu0 0.0
        %869 = vmatpush1.msra.mxu0 0.0
        %870 = vmatprep.subr.mxu0 0.0
        %871 = vmatpush1.msra.mxu0 0.0
        %872 = vmatprep.subr.mxu0 0.0
        %873 = vmatpush1.msra.mxu0 0.0
        %874 = vmatprep.subr.mxu0 0.0
        %875 = vmatpush1.msra.mxu0 0.0
        %876 = vmatprep.subr.mxu0 0.0
        %877 = vmatpush1.msra.mxu0 0.0
        %878 = vmatprep.subr.mxu0 0.0
        %879 = vmatpush1.msra.mxu0 0.0
        %880 = vmatprep.subr.mxu0 0.0
        %881 = vmatpush1.msra.mxu0 0.0
        %882 = vmatprep.subr.mxu0 0.0
        %883 = vmatpush1.msra.mxu0 0.0
        %884 = vmatprep.subr.mxu0 0.0
        %885 = vmatpush1.msra.mxu0 0.0
        %886 = vmatprep.subr.mxu0 0.0
        %887 = vmatpush1.msra.mxu0 0.0
        %888 = vmatprep.subr.mxu0 0.0
        %889 = vmatpush1.msra.mxu0 0.0
        %890 = vmatprep.subr.mxu0 0.0
        %891 = vmatpush1.msra.mxu0 0.0
        %892 = vmatprep.subr.mxu0 0.0
        %893 = vmatpush1.msra.mxu0 0.0
        %894 = vmatprep.subr.mxu0 0.0
        %895 = vmatpush1.msra.mxu0 0.0
        %896 = vmatprep.subr.mxu0 0.0
        %897 = vmatpush1.msra.mxu0 0.0
        %898 = vmatprep.subr.mxu0 0.0
        %899 = vmatpush1.msra.mxu0 0.0
        %900 = vmatprep.mubr.f32.mxu0 0.0
        %901 = vmatmul.mubr.f32.gmra.mrb[0].mxu0 %v306
        %v902 = vpop.f32.mrb[0].mxu0
        %v903 = vadd.f32 0.0, %v902
        %v904 = vpop.f32.mrb[0].mxu0
        %905 = vmatprep.mubr.f32.mxu0 0.0
        %906 = vmatmul.mubr.f32.gmra.mrb[0].mxu0 %v309
        %v907 = vpop.f32.mrb[0].mxu0
        %v908 = vadd.f32 0.0, %v907
        %v909 = vpop.f32.mrb[0].mxu0
        %910 = vdwg.mxu0
        %911 = vmatprep.subr.mxu0 0.0
        %912 = vmatpush1.msra.mxu0 %v280
        %913 = vmatprep.subr.mxu0 0.0
        %914 = vmatpush1.msra.mxu0 %v281
        %915 = vmatprep.subr.mxu0 0.0
        %916 = vmatpush1.msra.mxu0 0.0
        %917 = vmatprep.subr.mxu0 0.0
        %918 = vmatpush1.msra.mxu0 0.0
        %919 = vmatprep.subr.mxu0 0.0
        %920 = vmatpush1.msra.mxu0 0.0
        %921 = vmatprep.subr.mxu0 0.0
        %922 = vmatpush1.msra.mxu0 0.0
        %923 = vmatprep.subr.mxu0 0.0
        %924 = vmatpush1.msra.mxu0 0.0
        %925 = vmatprep.subr.mxu0 0.0
        %926 = vmatpush1.msra.mxu0 0.0
        %927 = vmatprep.subr.mxu0 0.0
        %928 = vmatpush1.msra.mxu0 0.0
        %929 = vmatprep.subr.mxu0 0.0
        %930 = vmatpush1.msra.mxu0 0.0
        %931 = vmatprep.subr.mxu0 0.0
        %932 = vmatpush1.msra.mxu0 0.0
        %933 = vmatprep.subr.mxu0 0.0
        %934 = vmatpush1.msra.mxu0 0.0
        %935 = vmatprep.subr.mxu0 0.0
        %936 = vmatpush1.msra.mxu0 0.0
        %937 = vmatprep.subr.mxu0 0.0
        %938 = vmatpush1.msra.mxu0 0.0
        %939 = vmatprep.subr.mxu0 0.0
        %940 = vmatpush1.msra.mxu0 0.0
        %941 = vmatprep.subr.mxu0 0.0
        %942 = vmatpush1.msra.mxu0 0.0
        %943 = vmatprep.subr.mxu0 0.0
        %944 = vmatpush1.msra.mxu0 0.0
        %945 = vmatprep.subr.mxu0 0.0
        %946 = vmatpush1.msra.mxu0 0.0
        %947 = vmatprep.subr.mxu0 0.0
        %948 = vmatpush1.msra.mxu0 0.0
        %949 = vmatprep.subr.mxu0 0.0
        %950 = vmatpush1.msra.mxu0 0.0
        %951 = vmatprep.subr.mxu0 0.0
        %952 = vmatpush1.msra.mxu0 0.0
        %953 = vmatprep.subr.mxu0 0.0
        %954 = vmatpush1.msra.mxu0 0.0
        %955 = vmatprep.subr.mxu0 0.0
        %956 = vmatpush1.msra.mxu0 0.0
        %957 = vmatprep.subr.mxu0 0.0
        %958 = vmatpush1.msra.mxu0 0.0
        %959 = vmatprep.subr.mxu0 0.0
        %960 = vmatpush1.msra.mxu0 0.0
        %961 = vmatprep.subr.mxu0 0.0
        %962 = vmatpush1.msra.mxu0 0.0
        %963 = vmatprep.subr.mxu0 0.0
        %964 = vmatpush1.msra.mxu0 0.0
        %965 = vmatprep.subr.mxu0 0.0
        %966 = vmatpush1.msra.mxu0 0.0
        %967 = vmatprep.subr.mxu0 0.0
        %968 = vmatpush1.msra.mxu0 0.0
        %969 = vmatprep.subr.mxu0 0.0
        %970 = vmatpush1.msra.mxu0 0.0
        %971 = vmatprep.subr.mxu0 0.0
        %972 = vmatpush1.msra.mxu0 0.0
        %973 = vmatprep.subr.mxu0 0.0
        %974 = vmatpush1.msra.mxu0 0.0
        %975 = vmatprep.mubr.f32.mxu0 0.0
        %976 = vmatmul.mubr.f32.gmra.mrb[0].mxu0 %v306
        %v977 = vpop.f32.mrb[0].mxu0
        %v978 = vadd.f32 0.0, %v977
        %v979 = vpop.f32.mrb[0].mxu0
        %980 = vmatprep.mubr.f32.mxu0 0.0
        %981 = vmatmul.mubr.f32.gmra.mrb[0].mxu0 %v309
        %v982 = vpop.f32.mrb[0].mxu0
        %v983 = vadd.f32 0.0, %v982
        %v984 = vpop.f32.mrb[0].mxu0
        %985 = vdwg.mxu0
        %986 = vmatprep.subr.mxu0 0.0
        %987 = vmatpush1.msra.mxu0 %v282
        %988 = vmatprep.subr.mxu0 0.0
        %989 = vmatpush1.msra.mxu0 %v283
        %990 = vmatprep.subr.mxu0 0.0
        %991 = vmatpush1.msra.mxu0 0.0
        %992 = vmatprep.subr.mxu0 0.0
        %993 = vmatpush1.msra.mxu0 0.0
        %994 = vmatprep.subr.mxu0 0.0
        %995 = vmatpush1.msra.mxu0 0.0
        %996 = vmatprep.subr.mxu0 0.0
        %997 = vmatpush1.msra.mxu0 0.0
        %998 = vmatprep.subr.mxu0 0.0
        %999 = vmatpush1.msra.mxu0 0.0
        %1000 = vmatprep.subr.mxu0 0.0
        %1001 = vmatpush1.msra.mxu0 0.0
        %1002 = vmatprep.subr.mxu0 0.0
        %1003 = vmatpush1.msra.mxu0 0.0
        %1004 = vmatprep.subr.mxu0 0.0
        %1005 = vmatpush1.msra.mxu0 0.0
        %1006 = vmatprep.subr.mxu0 0.0
        %1007 = vmatpush1.msra.mxu0 0.0
        %1008 = vmatprep.subr.mxu0 0.0
        %1009 = vmatpush1.msra.mxu0 0.0
        %1010 = vmatprep.subr.mxu0 0.0
        %1011 = vmatpush1.msra.mxu0 0.0
        %1012 = vmatprep.subr.mxu0 0.0
        %1013 = vmatpush1.msra.mxu0 0.0
        %1014 = vmatprep.subr.mxu0 0.0
        %1015 = vmatpush1.msra.mxu0 0.0
        %1016 = vmatprep.subr.mxu0 0.0
        %1017 = vmatpush1.msra.mxu0 0.0
        %1018 = vmatprep.subr.mxu0 0.0
        %1019 = vmatpush1.msra.mxu0 0.0
        %1020 = vmatprep.subr.mxu0 0.0
        %1021 = vmatpush1.msra.mxu0 0.0
        %1022 = vmatprep.subr.mxu0 0.0
        %1023 = vmatpush1.msra.mxu0 0.0
        %1024 = vmatprep.subr.mxu0 0.0
        %1025 = vmatpush1.msra.mxu0 0.0
        %1026 = vmatprep.subr.mxu0 0.0
        %1027 = vmatpush1.msra.mxu0 0.0
        %1028 = vmatprep.subr.mxu0 0.0
        %1029 = vmatpush1.msra.mxu0 0.0
        %1030 = vmatprep.subr.mxu0 0.0
        %1031 = vmatpush1.msra.mxu0 0.0
        %1032 = vmatprep.subr.mxu0 0.0
        %1033 = vmatpush1.msra.mxu0 0.0
        %1034 = vmatprep.subr.mxu0 0.0
        %1035 = vmatpush1.msra.mxu0 0.0
        %1036 = vmatprep.subr.mxu0 0.0
        %1037 = vmatpush1.msra.mxu0 0.0
        %1038 = vmatprep.subr.mxu0 0.0
        %1039 = vmatpush1.msra.mxu0 0.0
        %1040 = vmatprep.subr.mxu0 0.0
        %1041 = vmatpush1.msra.mxu0 0.0
        %1042 = vmatprep.subr.mxu0 0.0
        %1043 = vmatpush1.msra.mxu0 0.0
        %1044 = vmatprep.subr.mxu0 0.0
        %1045 = vmatpush1.msra.mxu0 0.0
        %1046 = vmatprep.subr.mxu0 0.0
        %1047 = vmatpush1.msra.mxu0 0.0
        %1048 = vmatprep.subr.mxu0 0.0
        %1049 = vmatpush1.msra.mxu0 0.0
        %1050 = vmatprep.mubr.f32.mxu0 0.0
        %1051 = vmatmul.mubr.f32.gmra.mrb[0].mxu0 %v306
        %v1052 = vpop.f32.mrb[0].mxu0
        %v1053 = vadd.f32 0.0, %v1052
        %v1054 = vpop.f32.mrb[0].mxu0
        %1055 = vmatprep.mubr.f32.mxu0 0.0
        %1056 = vmatmul.mubr.f32.gmra.mrb[0].mxu0 %v309
        %v1057 = vpop.f32.mrb[0].mxu0
        %v1058 = vadd.f32 0.0, %v1057
        %v1059 = vpop.f32.mrb[0].mxu0
        %1060 = vdwg.mxu0
        %1061 = vmatprep.subr.mxu0 0.0
        %1062 = vmatpush1.msra.mxu0 %v284
        %1063 = vmatprep.subr.mxu0 0.0
        %1064 = vmatpush1.msra.mxu0 %v285
        %1065 = vmatprep.subr.mxu0 0.0
        %1066 = vmatpush1.msra.mxu0 0.0
        %1067 = vmatprep.subr.mxu0 0.0
        %1068 = vmatpush1.msra.mxu0 0.0
        %1069 = vmatprep.subr.mxu0 0.0
        %1070 = vmatpush1.msra.mxu0 0.0
        %1071 = vmatprep.subr.mxu0 0.0
        %1072 = vmatpush1.msra.mxu0 0.0
        %1073 = vmatprep.subr.mxu0 0.0
        %1074 = vmatpush1.msra.mxu0 0.0
        %1075 = vmatprep.subr.mxu0 0.0
        %1076 = vmatpush1.msra.mxu0 0.0
        %1077 = vmatprep.subr.mxu0 0.0
        %1078 = vmatpush1.msra.mxu0 0.0
        %1079 = vmatprep.subr.mxu0 0.0
        %1080 = vmatpush1.msra.mxu0 0.0
        %1081 = vmatprep.subr.mxu0 0.0
        %1082 = vmatpush1.msra.mxu0 0.0
        %1083 = vmatprep.subr.mxu0 0.0
        %1084 = vmatpush1.msra.mxu0 0.0
        %1085 = vmatprep.subr.mxu0 0.0
        %1086 = vmatpush1.msra.mxu0 0.0
        %1087 = vmatprep.subr.mxu0 0.0
        %1088 = vmatpush1.msra.mxu0 0.0
        %1089 = vmatprep.subr.mxu0 0.0
        %1090 = vmatpush1.msra.mxu0 0.0
        %1091 = vmatprep.subr.mxu0 0.0
        %1092 = vmatpush1.msra.mxu0 0.0
        %1093 = vmatprep.subr.mxu0 0.0
        %1094 = vmatpush1.msra.mxu0 0.0
        %1095 = vmatprep.subr.mxu0 0.0
        %1096 = vmatpush1.msra.mxu0 0.0
        %1097 = vmatprep.subr.mxu0 0.0
        %1098 = vmatpush1.msra.mxu0 0.0
        %1099 = vmatprep.subr.mxu0 0.0
        %1100 = vmatpush1.msra.mxu0 0.0
        %1101 = vmatprep.subr.mxu0 0.0
        %1102 = vmatpush1.msra.mxu0 0.0
        %1103 = vmatprep.subr.mxu0 0.0
        %1104 = vmatpush1.msra.mxu0 0.0
        %1105 = vmatprep.subr.mxu0 0.0
        %1106 = vmatpush1.msra.mxu0 0.0
        %1107 = vmatprep.subr.mxu0 0.0
        %1108 = vmatpush1.msra.mxu0 0.0
        %1109 = vmatprep.subr.mxu0 0.0
        %1110 = vmatpush1.msra.mxu0 0.0
        %1111 = vmatprep.subr.mxu0 0.0
        %1112 = vmatpush1.msra.mxu0 0.0
        %1113 = vmatprep.subr.mxu0 0.0
        %1114 = vmatpush1.msra.mxu0 0.0
        %1115 = vmatprep.subr.mxu0 0.0
        %1116 = vmatpush1.msra.mxu0 0.0
        %1117 = vmatprep.subr.mxu0 0.0
        %1118 = vmatpush1.msra.mxu0 0.0
        %1119 = vmatprep.subr.mxu0 0.0
        %1120 = vmatpush1.msra.mxu0 0.0
        %1121 = vmatprep.subr.mxu0 0.0
        %1122 = vmatpush1.msra.mxu0 0.0
        %1123 = vmatprep.subr.mxu0 0.0
        %1124 = vmatpush1.msra.mxu0 0.0
        %1125 = vmatprep.mubr.f32.mxu0 0.0
        %1126 = vmatmul.mubr.f32.gmra.mrb[0].mxu0 %v306
        %v1127 = vpop.f32.mrb[0].mxu0
        %v1128 = vadd.f32 0.0, %v1127
        %v1129 = vpop.f32.mrb[0].mxu0
        %1130 = vmatprep.mubr.f32.mxu0 0.0
        %1131 = vmatmul.mubr.f32.gmra.mrb[0].mxu0 %v309
        %v1132 = vpop.f32.mrb[0].mxu0
        %v1133 = vadd.f32 0.0, %v1132
        %v1134 = vpop.f32.mrb[0].mxu0
        %1135 = vdwg.mxu0
        %1136 = vmatprep.subr.mxu0 0.0
        %1137 = vmatpush1.msra.mxu0 %v286
        %1138 = vmatprep.subr.mxu0 0.0
        %1139 = vmatpush1.msra.mxu0 %v287
        %1140 = vmatprep.subr.mxu0 0.0
        %1141 = vmatpush1.msra.mxu0 0.0
        %1142 = vmatprep.subr.mxu0 0.0
        %1143 = vmatpush1.msra.mxu0 0.0
        %1144 = vmatprep.subr.mxu0 0.0
        %1145 = vmatpush1.msra.mxu0 0.0
        %1146 = vmatprep.subr.mxu0 0.0
        %1147 = vmatpush1.msra.mxu0 0.0
        %1148 = vmatprep.subr.mxu0 0.0
        %1149 = vmatpush1.msra.mxu0 0.0
        %1150 = vmatprep.subr.mxu0 0.0
        %1151 = vmatpush1.msra.mxu0 0.0
        %1152 = vmatprep.subr.mxu0 0.0
        %1153 = vmatpush1.msra.mxu0 0.0
        %1154 = vmatprep.subr.mxu0 0.0
        %1155 = vmatpush1.msra.mxu0 0.0
        %1156 = vmatprep.subr.mxu0 0.0
        %1157 = vmatpush1.msra.mxu0 0.0
        %1158 = vmatprep.subr.mxu0 0.0
        %1159 = vmatpush1.msra.mxu0 0.0
        %1160 = vmatprep.subr.mxu0 0.0
        %1161 = vmatpush1.msra.mxu0 0.0
        %1162 = vmatprep.subr.mxu0 0.0
        %1163 = vmatpush1.msra.mxu0 0.0
        %1164 = vmatprep.subr.mxu0 0.0
        %1165 = vmatpush1.msra.mxu0 0.0
        %1166 = vmatprep.subr.mxu0 0.0
        %1167 = vmatpush1.msra.mxu0 0.0
        %1168 = vmatprep.subr.mxu0 0.0
        %1169 = vmatpush1.msra.mxu0 0.0
        %1170 = vmatprep.subr.mxu0 0.0
        %1171 = vmatpush1.msra.mxu0 0.0
        %1172 = vmatprep.subr.mxu0 0.0
        %1173 = vmatpush1.msra.mxu0 0.0
        %1174 = vmatprep.subr.mxu0 0.0
        %1175 = vmatpush1.msra.mxu0 0.0
        %1176 = vmatprep.subr.mxu0 0.0
        %1177 = vmatpush1.msra.mxu0 0.0
        %1178 = vmatprep.subr.mxu0 0.0
        %1179 = vmatpush1.msra.mxu0 0.0
        %1180 = vmatprep.subr.mxu0 0.0
        %1181 = vmatpush1.msra.mxu0 0.0
        %1182 = vmatprep.subr.mxu0 0.0
        %1183 = vmatpush1.msra.mxu0 0.0
        %1184 = vmatprep.subr.mxu0 0.0
        %1185 = vmatpush1.msra.mxu0 0.0
        %1186 = vmatprep.subr.mxu0 0.0
        %1187 = vmatpush1.msra.mxu0 0.0
        %1188 = vmatprep.subr.mxu0 0.0
        %1189 = vmatpush1.msra.mxu0 0.0
        %1190 = vmatprep.subr.mxu0 0.0
        %1191 = vmatpush1.msra.mxu0 0.0
        %1192 = vmatprep.subr.mxu0 0.0
        %1193 = vmatpush1.msra.mxu0 0.0
        %1194 = vmatprep.subr.mxu0 0.0
        %1195 = vmatpush1.msra.mxu0 0.0
        %1196 = vmatprep.subr.mxu0 0.0
        %1197 = vmatpush1.msra.mxu0 0.0
        %1198 = vmatprep.subr.mxu0 0.0
        %1199 = vmatpush1.msra.mxu0 0.0
        %1200 = vmatprep.mubr.f32.mxu0 0.0
        %1201 = vmatmul.mubr.f32.gmra.mrb[0].mxu0 %v306
        %v1202 = vpop.f32.mrb[0].mxu0
        %v1203 = vadd.f32 0.0, %v1202
        %v1204 = vpop.f32.mrb[0].mxu0
        %1205 = vmatprep.mubr.f32.mxu0 0.0
        %1206 = vmatmul.mubr.f32.gmra.mrb[0].mxu0 %v309
        %v1207 = vpop.f32.mrb[0].mxu0
        %v1208 = vadd.f32 0.0, %v1207
        %v1209 = vpop.f32.mrb[0].mxu0
        %1210 = vdwg.mxu0
        %1211 = vmatprep.subr.mxu0 0.0
        %1212 = vmatpush1.msra.mxu0 %v288
        %1213 = vmatprep.subr.mxu0 0.0
        %1214 = vmatpush1.msra.mxu0 %v289
        %1215 = vmatprep.subr.mxu0 0.0
        %1216 = vmatpush1.msra.mxu0 0.0
        %1217 = vmatprep.subr.mxu0 0.0
        %1218 = vmatpush1.msra.mxu0 0.0
        %1219 = vmatprep.subr.mxu0 0.0
        %1220 = vmatpush1.msra.mxu0 0.0
        %1221 = vmatprep.subr.mxu0 0.0
        %1222 = vmatpush1.msra.mxu0 0.0
        %1223 = vmatprep.subr.mxu0 0.0
        %1224 = vmatpush1.msra.mxu0 0.0
        %1225 = vmatprep.subr.mxu0 0.0
        %1226 = vmatpush1.msra.mxu0 0.0
        %1227 = vmatprep.subr.mxu0 0.0
        %1228 = vmatpush1.msra.mxu0 0.0
        %1229 = vmatprep.subr.mxu0 0.0
        %1230 = vmatpush1.msra.mxu0 0.0
        %1231 = vmatprep.subr.mxu0 0.0
        %1232 = vmatpush1.msra.mxu0 0.0
        %1233 = vmatprep.subr.mxu0 0.0
        %1234 = vmatpush1.msra.mxu0 0.0
        %1235 = vmatprep.subr.mxu0 0.0
        %1236 = vmatpush1.msra.mxu0 0.0
        %1237 = vmatprep.subr.mxu0 0.0
        %1238 = vmatpush1.msra.mxu0 0.0
        %1239 = vmatprep.subr.mxu0 0.0
        %1240 = vmatpush1.msra.mxu0 0.0
        %1241 = vmatprep.subr.mxu0 0.0
        %1242 = vmatpush1.msra.mxu0 0.0
        %1243 = vmatprep.subr.mxu0 0.0
        %1244 = vmatpush1.msra.mxu0 0.0
        %1245 = vmatprep.subr.mxu0 0.0
        %1246 = vmatpush1.msra.mxu0 0.0
        %1247 = vmatprep.subr.mxu0 0.0
        %1248 = vmatpush1.msra.mxu0 0.0
        %1249 = vmatprep.subr.mxu0 0.0
        %1250 = vmatpush1.msra.mxu0 0.0
        %1251 = vmatprep.subr.mxu0 0.0
        %1252 = vmatpush1.msra.mxu0 0.0
        %1253 = vmatprep.subr.mxu0 0.0
        %1254 = vmatpush1.msra.mxu0 0.0
        %1255 = vmatprep.subr.mxu0 0.0
        %1256 = vmatpush1.msra.mxu0 0.0
        %1257 = vmatprep.subr.mxu0 0.0
        %1258 = vmatpush1.msra.mxu0 0.0
        %1259 = vmatprep.subr.mxu0 0.0
        %1260 = vmatpush1.msra.mxu0 0.0
        %1261 = vmatprep.subr.mxu0 0.0
        %1262 = vmatpush1.msra.mxu0 0.0
        %1263 = vmatprep.subr.mxu0 0.0
        %1264 = vmatpush1.msra.mxu0 0.0
        %1265 = vmatprep.subr.mxu0 0.0
        %1266 = vmatpush1.msra.mxu0 0.0
        %1267 = vmatprep.subr.mxu0 0.0
        %1268 = vmatpush1.msra.mxu0 0.0
        %1269 = vmatprep.subr.mxu0 0.0
        %1270 = vmatpush1.msra.mxu0 0.0
        %1271 = vmatprep.subr.mxu0 0.0
        %1272 = vmatpush1.msra.mxu0 0.0
        %1273 = vmatprep.subr.mxu0 0.0
        %1274 = vmatpush1.msra.mxu0 0.0
        %1275 = vmatprep.mubr.f32.mxu0 0.0
        %1276 = vmatmul.mubr.f32.gmra.mrb[0].mxu0 %v306
        %v1277 = vpop.f32.mrb[0].mxu0
        %v1278 = vadd.f32 0.0, %v1277
        %v1279 = vpop.f32.mrb[0].mxu0
        %1280 = vmatprep.mubr.f32.mxu0 0.0
        %1281 = vmatmul.mubr.f32.gmra.mrb[0].mxu0 %v309
        %v1282 = vpop.f32.mrb[0].mxu0
        %v1283 = vadd.f32 0.0, %v1282
        %v1284 = vpop.f32.mrb[0].mxu0
        %1285 = vdwg.mxu0
        %1286 = vmatprep.subr.mxu0 0.0
        %1287 = vmatpush1.msra.mxu0 %v290
        %1288 = vmatprep.subr.mxu0 0.0
        %1289 = vmatpush1.msra.mxu0 %v291
        %1290 = vmatprep.subr.mxu0 0.0
        %1291 = vmatpush1.msra.mxu0 0.0
        %1292 = vmatprep.subr.mxu0 0.0
        %1293 = vmatpush1.msra.mxu0 0.0
        %1294 = vmatprep.subr.mxu0 0.0
        %1295 = vmatpush1.msra.mxu0 0.0
        %1296 = vmatprep.subr.mxu0 0.0
        %1297 = vmatpush1.msra.mxu0 0.0
        %1298 = vmatprep.subr.mxu0 0.0
        %1299 = vmatpush1.msra.mxu0 0.0
        %1300 = vmatprep.subr.mxu0 0.0
        %1301 = vmatpush1.msra.mxu0 0.0
        %1302 = vmatprep.subr.mxu0 0.0
        %1303 = vmatpush1.msra.mxu0 0.0
        %1304 = vmatprep.subr.mxu0 0.0
        %1305 = vmatpush1.msra.mxu0 0.0
        %1306 = vmatprep.subr.mxu0 0.0
        %1307 = vmatpush1.msra.mxu0 0.0
        %1308 = vmatprep.subr.mxu0 0.0
        %1309 = vmatpush1.msra.mxu0 0.0
        %1310 = vmatprep.subr.mxu0 0.0
        %1311 = vmatpush1.msra.mxu0 0.0
        %1312 = vmatprep.subr.mxu0 0.0
        %1313 = vmatpush1.msra.mxu0 0.0
        %1314 = vmatprep.subr.mxu0 0.0
        %1315 = vmatpush1.msra.mxu0 0.0
        %1316 = vmatprep.subr.mxu0 0.0
        %1317 = vmatpush1.msra.mxu0 0.0
        %1318 = vmatprep.subr.mxu0 0.0
        %1319 = vmatpush1.msra.mxu0 0.0
        %1320 = vmatprep.subr.mxu0 0.0
        %1321 = vmatpush1.msra.mxu0 0.0
        %1322 = vmatprep.subr.mxu0 0.0
        %1323 = vmatpush1.msra.mxu0 0.0
        %1324 = vmatprep.subr.mxu0 0.0
        %1325 = vmatpush1.msra.mxu0 0.0
        %1326 = vmatprep.subr.mxu0 0.0
        %1327 = vmatpush1.msra.mxu0 0.0
        %1328 = vmatprep.subr.mxu0 0.0
        %1329 = vmatpush1.msra.mxu0 0.0
        %1330 = vmatprep.subr.mxu0 0.0
        %1331 = vmatpush1.msra.mxu0 0.0
        %1332 = vmatprep.subr.mxu0 0.0
        %1333 = vmatpush1.msra.mxu0 0.0
        %1334 = vmatprep.subr.mxu0 0.0
        %1335 = vmatpush1.msra.mxu0 0.0
        %1336 = vmatprep.subr.mxu0 0.0
        %1337 = vmatpush1.msra.mxu0 0.0
        %1338 = vmatprep.subr.mxu0 0.0
        %1339 = vmatpush1.msra.mxu0 0.0
        %1340 = vmatprep.subr.mxu0 0.0
        %1341 = vmatpush1.msra.mxu0 0.0
        %1342 = vmatprep.subr.mxu0 0.0
        %1343 = vmatpush1.msra.mxu0 0.0
        %1344 = vmatprep.subr.mxu0 0.0
        %1345 = vmatpush1.msra.mxu0 0.0
        %1346 = vmatprep.subr.mxu0 0.0
        %1347 = vmatpush1.msra.mxu0 0.0
        %1348 = vmatprep.subr.mxu0 0.0
        %1349 = vmatpush1.msra.mxu0 0.0
        %1350 = vmatprep.mubr.f32.mxu0 0.0
        %1351 = vmatmul.mubr.f32.gmra.mrb[0].mxu0 %v306
        %v1352 = vpop.f32.mrb[0].mxu0
        %v1353 = vadd.f32 0.0, %v1352
        %v1354 = vpop.f32.mrb[0].mxu0
        %1355 = vmatprep.mubr.f32.mxu0 0.0
        %1356 = vmatmul.mubr.f32.gmra.mrb[0].mxu0 %v309
        %v1357 = vpop.f32.mrb[0].mxu0
        %v1358 = vadd.f32 0.0, %v1357
        %v1359 = vpop.f32.mrb[0].mxu0
        %1360 = vdwg.mxu0
        %1361 = vmatprep.subr.mxu0 0.0
        %1362 = vmatpush1.msra.mxu0 %v292
        %1363 = vmatprep.subr.mxu0 0.0
        %1364 = vmatpush1.msra.mxu0 %v293
        %1365 = vmatprep.subr.mxu0 0.0
        %1366 = vmatpush1.msra.mxu0 0.0
        %1367 = vmatprep.subr.mxu0 0.0
        %1368 = vmatpush1.msra.mxu0 0.0
        %1369 = vmatprep.subr.mxu0 0.0
        %1370 = vmatpush1.msra.mxu0 0.0
        %1371 = vmatprep.subr.mxu0 0.0
        %1372 = vmatpush1.msra.mxu0 0.0
        %1373 = vmatprep.subr.mxu0 0.0
        %1374 = vmatpush1.msra.mxu0 0.0
        %1375 = vmatprep.subr.mxu0 0.0
        %1376 = vmatpush1.msra.mxu0 0.0
        %1377 = vmatprep.subr.mxu0 0.0
        %1378 = vmatpush1.msra.mxu0 0.0
        %1379 = vmatprep.subr.mxu0 0.0
        %1380 = vmatpush1.msra.mxu0 0.0
        %1381 = vmatprep.subr.mxu0 0.0
        %1382 = vmatpush1.msra.mxu0 0.0
        %1383 = vmatprep.subr.mxu0 0.0
        %1384 = vmatpush1.msra.mxu0 0.0
        %1385 = vmatprep.subr.mxu0 0.0
        %1386 = vmatpush1.msra.mxu0 0.0
        %1387 = vmatprep.subr.mxu0 0.0
        %1388 = vmatpush1.msra.mxu0 0.0
        %1389 = vmatprep.subr.mxu0 0.0
        %1390 = vmatpush1.msra.mxu0 0.0
        %1391 = vmatprep.subr.mxu0 0.0
        %1392 = vmatpush1.msra.mxu0 0.0
        %1393 = vmatprep.subr.mxu0 0.0
        %1394 = vmatpush1.msra.mxu0 0.0
        %1395 = vmatprep.subr.mxu0 0.0
        %1396 = vmatpush1.msra.mxu0 0.0
        %1397 = vmatprep.subr.mxu0 0.0
        %1398 = vmatpush1.msra.mxu0 0.0
        %1399 = vmatprep.subr.mxu0 0.0
        %1400 = vmatpush1.msra.mxu0 0.0
        %1401 = vmatprep.subr.mxu0 0.0
        %1402 = vmatpush1.msra.mxu0 0.0
        %1403 = vmatprep.subr.mxu0 0.0
        %1404 = vmatpush1.msra.mxu0 0.0
        %1405 = vmatprep.subr.mxu0 0.0
        %1406 = vmatpush1.msra.mxu0 0.0
        %1407 = vmatprep.subr.mxu0 0.0
        %1408 = vmatpush1.msra.mxu0 0.0
        %1409 = vmatprep.subr.mxu0 0.0
        %1410 = vmatpush1.msra.mxu0 0.0
        %1411 = vmatprep.subr.mxu0 0.0
        %1412 = vmatpush1.msra.mxu0 0.0
        %1413 = vmatprep.subr.mxu0 0.0
        %1414 = vmatpush1.msra.mxu0 0.0
        %1415 = vmatprep.subr.mxu0 0.0
        %1416 = vmatpush1.msra.mxu0 0.0
        %1417 = vmatprep.subr.mxu0 0.0
        %1418 = vmatpush1.msra.mxu0 0.0
        %1419 = vmatprep.subr.mxu0 0.0
        %1420 = vmatpush1.msra.mxu0 0.0
        %1421 = vmatprep.subr.mxu0 0.0
        %1422 = vmatpush1.msra.mxu0 0.0
        %1423 = vmatprep.subr.mxu0 0.0
        %1424 = vmatpush1.msra.mxu0 0.0
        %1425 = vmatprep.mubr.f32.mxu0 0.0
        %1426 = vmatmul.mubr.f32.gmra.mrb[0].mxu0 %v306
        %v1427 = vpop.f32.mrb[0].mxu0
        %v1428 = vadd.f32 0.0, %v1427
        %v1429 = vpop.f32.mrb[0].mxu0
        %1430 = vmatprep.mubr.f32.mxu0 0.0
        %1431 = vmatmul.mubr.f32.gmra.mrb[0].mxu0 %v309
        %v1432 = vpop.f32.mrb[0].mxu0
        %v1433 = vadd.f32 0.0, %v1432
        %v1434 = vpop.f32.mrb[0].mxu0
        %1435 = vdwg.mxu0
        %1436 = vmatprep.subr.mxu0 0.0
        %1437 = vmatpush1.msra.mxu0 %v294
        %1438 = vmatprep.subr.mxu0 0.0
        %1439 = vmatpush1.msra.mxu0 %v295
        %1440 = vmatprep.subr.mxu0 0.0
        %1441 = vmatpush1.msra.mxu0 0.0
        %1442 = vmatprep.subr.mxu0 0.0
        %1443 = vmatpush1.msra.mxu0 0.0
        %1444 = vmatprep.subr.mxu0 0.0
        %1445 = vmatpush1.msra.mxu0 0.0
        %1446 = vmatprep.subr.mxu0 0.0
        %1447 = vmatpush1.msra.mxu0 0.0
        %1448 = vmatprep.subr.mxu0 0.0
        %1449 = vmatpush1.msra.mxu0 0.0
        %1450 = vmatprep.subr.mxu0 0.0
        %1451 = vmatpush1.msra.mxu0 0.0
        %1452 = vmatprep.subr.mxu0 0.0
        %1453 = vmatpush1.msra.mxu0 0.0
        %1454 = vmatprep.subr.mxu0 0.0
        %1455 = vmatpush1.msra.mxu0 0.0
        %1456 = vmatprep.subr.mxu0 0.0
        %1457 = vmatpush1.msra.mxu0 0.0
        %1458 = vmatprep.subr.mxu0 0.0
        %1459 = vmatpush1.msra.mxu0 0.0
        %1460 = vmatprep.subr.mxu0 0.0
        %1461 = vmatpush1.msra.mxu0 0.0
        %1462 = vmatprep.subr.mxu0 0.0
        %1463 = vmatpush1.msra.mxu0 0.0
        %1464 = vmatprep.subr.mxu0 0.0
        %1465 = vmatpush1.msra.mxu0 0.0
        %1466 = vmatprep.subr.mxu0 0.0
        %1467 = vmatpush1.msra.mxu0 0.0
        %1468 = vmatprep.subr.mxu0 0.0
        %1469 = vmatpush1.msra.mxu0 0.0
        %1470 = vmatprep.subr.mxu0 0.0
        %1471 = vmatpush1.msra.mxu0 0.0
        %1472 = vmatprep.subr.mxu0 0.0
        %1473 = vmatpush1.msra.mxu0 0.0
        %1474 = vmatprep.subr.mxu0 0.0
        %1475 = vmatpush1.msra.mxu0 0.0
        %1476 = vmatprep.subr.mxu0 0.0
        %1477 = vmatpush1.msra.mxu0 0.0
        %1478 = vmatprep.subr.mxu0 0.0
        %1479 = vmatpush1.msra.mxu0 0.0
        %1480 = vmatprep.subr.mxu0 0.0
        %1481 = vmatpush1.msra.mxu0 0.0
        %1482 = vmatprep.subr.mxu0 0.0
        %1483 = vmatpush1.msra.mxu0 0.0
        %1484 = vmatprep.subr.mxu0 0.0
        %1485 = vmatpush1.msra.mxu0 0.0
        %1486 = vmatprep.subr.mxu0 0.0
        %1487 = vmatpush1.msra.mxu0 0.0
        %1488 = vmatprep.subr.mxu0 0.0
        %1489 = vmatpush1.msra.mxu0 0.0
        %1490 = vmatprep.subr.mxu0 0.0
        %1491 = vmatpush1.msra.mxu0 0.0
        %1492 = vmatprep.subr.mxu0 0.0
        %1493 = vmatpush1.msra.mxu0 0.0
        %1494 = vmatprep.subr.mxu0 0.0
        %1495 = vmatpush1.msra.mxu0 0.0
        %1496 = vmatprep.subr.mxu0 0.0
        %1497 = vmatpush1.msra.mxu0 0.0
        %1498 = vmatprep.subr.mxu0 0.0
        %1499 = vmatpush1.msra.mxu0 0.0
        %1500 = vmatprep.mubr.f32.mxu0 0.0
        %1501 = vmatmul.mubr.f32.gmra.mrb[0].mxu0 %v306
        %v1502 = vpop.f32.mrb[0].mxu0
        %v1503 = vadd.f32 0.0, %v1502
        %v1504 = vpop.f32.mrb[0].mxu0
        %1505 = vmatprep.mubr.f32.mxu0 0.0
        %1506 = vmatmul.mubr.f32.gmra.mrb[0].mxu0 %v309
        %v1507 = vpop.f32.mrb[0].mxu0
        %v1508 = vadd.f32 0.0, %v1507
        %v1509 = vpop.f32.mrb[0].mxu0
        %1510 = vdwg.mxu0
        %1511 = vmatprep.subr.mxu0 0.0
        %1512 = vmatpush1.msra.mxu0 %v296
        %1513 = vmatprep.subr.mxu0 0.0
        %1514 = vmatpush1.msra.mxu0 %v297
        %1515 = vmatprep.subr.mxu0 0.0
        %1516 = vmatpush1.msra.mxu0 0.0
        %1517 = vmatprep.subr.mxu0 0.0
        %1518 = vmatpush1.msra.mxu0 0.0
        %1519 = vmatprep.subr.mxu0 0.0
        %1520 = vmatpush1.msra.mxu0 0.0
        %1521 = vmatprep.subr.mxu0 0.0
        %1522 = vmatpush1.msra.mxu0 0.0
        %1523 = vmatprep.subr.mxu0 0.0
        %1524 = vmatpush1.msra.mxu0 0.0
        %1525 = vmatprep.subr.mxu0 0.0
        %1526 = vmatpush1.msra.mxu0 0.0
        %1527 = vmatprep.subr.mxu0 0.0
        %1528 = vmatpush1.msra.mxu0 0.0
        %1529 = vmatprep.subr.mxu0 0.0
        %1530 = vmatpush1.msra.mxu0 0.0
        %1531 = vmatprep.subr.mxu0 0.0
        %1532 = vmatpush1.msra.mxu0 0.0
        %1533 = vmatprep.subr.mxu0 0.0
        %1534 = vmatpush1.msra.mxu0 0.0
        %1535 = vmatprep.subr.mxu0 0.0
        %1536 = vmatpush1.msra.mxu0 0.0
        %1537 = vmatprep.subr.mxu0 0.0
        %1538 = vmatpush1.msra.mxu0 0.0
        %1539 = vmatprep.subr.mxu0 0.0
        %1540 = vmatpush1.msra.mxu0 0.0
        %1541 = vmatprep.subr.mxu0 0.0
        %1542 = vmatpush1.msra.mxu0 0.0
        %1543 = vmatprep.subr.mxu0 0.0
        %1544 = vmatpush1.msra.mxu0 0.0
        %1545 = vmatprep.subr.mxu0 0.0
        %1546 = vmatpush1.msra.mxu0 0.0
        %1547 = vmatprep.subr.mxu0 0.0
        %1548 = vmatpush1.msra.mxu0 0.0
        %1549 = vmatprep.subr.mxu0 0.0
        %1550 = vmatpush1.msra.mxu0 0.0
        %1551 = vmatprep.subr.mxu0 0.0
        %1552 = vmatpush1.msra.mxu0 0.0
        %1553 = vmatprep.subr.mxu0 0.0
        %1554 = vmatpush1.msra.mxu0 0.0
        %1555 = vmatprep.subr.mxu0 0.0
        %1556 = vmatpush1.msra.mxu0 0.0
        %1557 = vmatprep.subr.mxu0 0.0
        %1558 = vmatpush1.msra.mxu0 0.0
        %1559 = vmatprep.subr.mxu0 0.0
        %1560 = vmatpush1.msra.mxu0 0.0
        %1561 = vmatprep.subr.mxu0 0.0
        %1562 = vmatpush1.msra.mxu0 0.0
        %1563 = vmatprep.subr.mxu0 0.0
        %1564 = vmatpush1.msra.mxu0 0.0
        %1565 = vmatprep.subr.mxu0 0.0
        %1566 = vmatpush1.msra.mxu0 0.0
        %1567 = vmatprep.subr.mxu0 0.0
        %1568 = vmatpush1.msra.mxu0 0.0
        %1569 = vmatprep.subr.mxu0 0.0
        %1570 = vmatpush1.msra.mxu0 0.0
        %1571 = vmatprep.subr.mxu0 0.0
        %1572 = vmatpush1.msra.mxu0 0.0
        %1573 = vmatprep.subr.mxu0 0.0
        %1574 = vmatpush1.msra.mxu0 0.0
        %1575 = vmatprep.mubr.f32.mxu0 0.0
        %1576 = vmatmul.mubr.f32.gmra.mrb[0].mxu0 %v306
        %v1577 = vpop.f32.mrb[0].mxu0
        %v1578 = vadd.f32 0.0, %v1577
        %v1579 = vpop.f32.mrb[0].mxu0
        %1580 = vmatprep.mubr.f32.mxu0 0.0
        %1581 = vmatmul.mubr.f32.gmra.mrb[0].mxu0 %v309
        %v1582 = vpop.f32.mrb[0].mxu0
        %v1583 = vadd.f32 0.0, %v1582
        %v1584 = vpop.f32.mrb[0].mxu0
        %1585 = vdwg.mxu0
        %1586 = vmatprep.subr.mxu0 0.0
        %1587 = vmatpush1.msra.mxu0 %v298
        %1588 = vmatprep.subr.mxu0 0.0
        %1589 = vmatpush1.msra.mxu0 %v299
        %1590 = vmatprep.subr.mxu0 0.0
        %1591 = vmatpush1.msra.mxu0 0.0
        %1592 = vmatprep.subr.mxu0 0.0
        %1593 = vmatpush1.msra.mxu0 0.0
        %1594 = vmatprep.subr.mxu0 0.0
        %1595 = vmatpush1.msra.mxu0 0.0
        %1596 = vmatprep.subr.mxu0 0.0
        %1597 = vmatpush1.msra.mxu0 0.0
        %1598 = vmatprep.subr.mxu0 0.0
        %1599 = vmatpush1.msra.mxu0 0.0
        %1600 = vmatprep.subr.mxu0 0.0
        %1601 = vmatpush1.msra.mxu0 0.0
        %1602 = vmatprep.subr.mxu0 0.0
        %1603 = vmatpush1.msra.mxu0 0.0
        %1604 = vmatprep.subr.mxu0 0.0
        %1605 = vmatpush1.msra.mxu0 0.0
        %1606 = vmatprep.subr.mxu0 0.0
        %1607 = vmatpush1.msra.mxu0 0.0
        %1608 = vmatprep.subr.mxu0 0.0
        %1609 = vmatpush1.msra.mxu0 0.0
        %1610 = vmatprep.subr.mxu0 0.0
        %1611 = vmatpush1.msra.mxu0 0.0
        %1612 = vmatprep.subr.mxu0 0.0
        %1613 = vmatpush1.msra.mxu0 0.0
        %1614 = vmatprep.subr.mxu0 0.0
        %1615 = vmatpush1.msra.mxu0 0.0
        %1616 = vmatprep.subr.mxu0 0.0
        %1617 = vmatpush1.msra.mxu0 0.0
        %1618 = vmatprep.subr.mxu0 0.0
        %1619 = vmatpush1.msra.mxu0 0.0
        %1620 = vmatprep.subr.mxu0 0.0
        %1621 = vmatpush1.msra.mxu0 0.0
        %1622 = vmatprep.subr.mxu0 0.0
        %1623 = vmatpush1.msra.mxu0 0.0
        %1624 = vmatprep.subr.mxu0 0.0
        %1625 = vmatpush1.msra.mxu0 0.0
        %1626 = vmatprep.subr.mxu0 0.0
        %1627 = vmatpush1.msra.mxu0 0.0
        %1628 = vmatprep.subr.mxu0 0.0
        %1629 = vmatpush1.msra.mxu0 0.0
        %1630 = vmatprep.subr.mxu0 0.0
        %1631 = vmatpush1.msra.mxu0 0.0
        %1632 = vmatprep.subr.mxu0 0.0
        %1633 = vmatpush1.msra.mxu0 0.0
        %1634 = vmatprep.subr.mxu0 0.0
        %1635 = vmatpush1.msra.mxu0 0.0
        %1636 = vmatprep.subr.mxu0 0.0
        %1637 = vmatpush1.msra.mxu0 0.0
        %1638 = vmatprep.subr.mxu0 0.0
        %1639 = vmatpush1.msra.mxu0 0.0
        %1640 = vmatprep.subr.mxu0 0.0
        %1641 = vmatpush1.msra.mxu0 0.0
        %1642 = vmatprep.subr.mxu0 0.0
        %1643 = vmatpush1.msra.mxu0 0.0
        %1644 = vmatprep.subr.mxu0 0.0
        %1645 = vmatpush1.msra.mxu0 0.0
        %1646 = vmatprep.subr.mxu0 0.0
        %1647 = vmatpush1.msra.mxu0 0.0
        %1648 = vmatprep.subr.mxu0 0.0
        %1649 = vmatpush1.msra.mxu0 0.0
        %1650 = vmatprep.mubr.f32.mxu0 0.0
        %1651 = vmatmul.mubr.f32.gmra.mrb[0].mxu0 %v306
        %v1652 = vpop.f32.mrb[0].mxu0
        %v1653 = vadd.f32 0.0, %v1652
        %v1654 = vpop.f32.mrb[0].mxu0
        %1655 = vmatprep.mubr.f32.mxu0 0.0
        %1656 = vmatmul.mubr.f32.gmra.mrb[0].mxu0 %v309
        %v1657 = vpop.f32.mrb[0].mxu0
        %v1658 = vadd.f32 0.0, %v1657
        %v1659 = vpop.f32.mrb[0].mxu0
        %1660 = vdwg.mxu0
        %1661 = vmatprep.subr.mxu0 0.0
        %1662 = vmatpush1.msra.mxu0 %v300
        %1663 = vmatprep.subr.mxu0 0.0
        %1664 = vmatpush1.msra.mxu0 %v301
        %1665 = vmatprep.subr.mxu0 0.0
        %1666 = vmatpush1.msra.mxu0 0.0
        %1667 = vmatprep.subr.mxu0 0.0
        %1668 = vmatpush1.msra.mxu0 0.0
        %1669 = vmatprep.subr.mxu0 0.0
        %1670 = vmatpush1.msra.mxu0 0.0
        %1671 = vmatprep.subr.mxu0 0.0
        %1672 = vmatpush1.msra.mxu0 0.0
        %1673 = vmatprep.subr.mxu0 0.0
        %1674 = vmatpush1.msra.mxu0 0.0
        %1675 = vmatprep.subr.mxu0 0.0
        %1676 = vmatpush1.msra.mxu0 0.0
        %1677 = vmatprep.subr.mxu0 0.0
        %1678 = vmatpush1.msra.mxu0 0.0
        %1679 = vmatprep.subr.mxu0 0.0
        %1680 = vmatpush1.msra.mxu0 0.0
        %1681 = vmatprep.subr.mxu0 0.0
        %1682 = vmatpush1.msra.mxu0 0.0
        %1683 = vmatprep.subr.mxu0 0.0
        %1684 = vmatpush1.msra.mxu0 0.0
        %1685 = vmatprep.subr.mxu0 0.0
        %1686 = vmatpush1.msra.mxu0 0.0
        %1687 = vmatprep.subr.mxu0 0.0
        %1688 = vmatpush1.msra.mxu0 0.0
        %1689 = vmatprep.subr.mxu0 0.0
        %1690 = vmatpush1.msra.mxu0 0.0
        %1691 = vmatprep.subr.mxu0 0.0
        %1692 = vmatpush1.msra.mxu0 0.0
        %1693 = vmatprep.subr.mxu0 0.0
        %1694 = vmatpush1.msra.mxu0 0.0
        %1695 = vmatprep.subr.mxu0 0.0
        %1696 = vmatpush1.msra.mxu0 0.0
        %1697 = vmatprep.subr.mxu0 0.0
        %1698 = vmatpush1.msra.mxu0 0.0
        %1699 = vmatprep.subr.mxu0 0.0
        %1700 = vmatpush1.msra.mxu0 0.0
        %1701 = vmatprep.subr.mxu0 0.0
        %1702 = vmatpush1.msra.mxu0 0.0
        %1703 = vmatprep.subr.mxu0 0.0
        %1704 = vmatpush1.msra.mxu0 0.0
        %1705 = vmatprep.subr.mxu0 0.0
        %1706 = vmatpush1.msra.mxu0 0.0
        %1707 = vmatprep.subr.mxu0 0.0
        %1708 = vmatpush1.msra.mxu0 0.0
        %1709 = vmatprep.subr.mxu0 0.0
        %1710 = vmatpush1.msra.mxu0 0.0
        %1711 = vmatprep.subr.mxu0 0.0
        %1712 = vmatpush1.msra.mxu0 0.0
        %1713 = vmatprep.subr.mxu0 0.0
        %1714 = vmatpush1.msra.mxu0 0.0
        %1715 = vmatprep.subr.mxu0 0.0
        %1716 = vmatpush1.msra.mxu0 0.0
        %1717 = vmatprep.subr.mxu0 0.0
        %1718 = vmatpush1.msra.mxu0 0.0
        %1719 = vmatprep.subr.mxu0 0.0
        %1720 = vmatpush1.msra.mxu0 0.0
        %1721 = vmatprep.subr.mxu0 0.0
        %1722 = vmatpush1.msra.mxu0 0.0
        %1723 = vmatprep.subr.mxu0 0.0
        %1724 = vmatpush1.msra.mxu0 0.0
        %1725 = vmatprep.mubr.f32.mxu0 0.0
        %1726 = vmatmul.mubr.f32.gmra.mrb[0].mxu0 %v306
        %v1727 = vpop.f32.mrb[0].mxu0
        %v1728 = vadd.f32 0.0, %v1727
        %v1729 = vpop.f32.mrb[0].mxu0
        %1730 = vmatprep.mubr.f32.mxu0 0.0
        %1731 = vmatmul.mubr.f32.gmra.mrb[0].mxu0 %v309
        %v1732 = vpop.f32.mrb[0].mxu0
        %v1733 = vadd.f32 0.0, %v1732
        %v1734 = vpop.f32.mrb[0].mxu0
        %1735 = vdwg.mxu0
        %1736 = vmatprep.subr.mxu0 0.0
        %1737 = vmatpush1.msra.mxu0 %v302
        %1738 = vmatprep.subr.mxu0 0.0
        %1739 = vmatpush1.msra.mxu0 %v303
        %1740 = vmatprep.subr.mxu0 0.0
        %1741 = vmatpush1.msra.mxu0 0.0
        %1742 = vmatprep.subr.mxu0 0.0
        %1743 = vmatpush1.msra.mxu0 0.0
        %1744 = vmatprep.subr.mxu0 0.0
        %1745 = vmatpush1.msra.mxu0 0.0
        %1746 = vmatprep.subr.mxu0 0.0
        %1747 = vmatpush1.msra.mxu0 0.0
        %1748 = vmatprep.subr.mxu0 0.0
        %1749 = vmatpush1.msra.mxu0 0.0
        %1750 = vmatprep.subr.mxu0 0.0
        %1751 = vmatpush1.msra.mxu0 0.0
        %1752 = vmatprep.subr.mxu0 0.0
        %1753 = vmatpush1.msra.mxu0 0.0
        %1754 = vmatprep.subr.mxu0 0.0
        %1755 = vmatpush1.msra.mxu0 0.0
        %1756 = vmatprep.subr.mxu0 0.0
        %1757 = vmatpush1.msra.mxu0 0.0
        %1758 = vmatprep.subr.mxu0 0.0
        %1759 = vmatpush1.msra.mxu0 0.0
        %1760 = vmatprep.subr.mxu0 0.0
        %1761 = vmatpush1.msra.mxu0 0.0
        %1762 = vmatprep.subr.mxu0 0.0
        %1763 = vmatpush1.msra.mxu0 0.0
        %1764 = vmatprep.subr.mxu0 0.0
        %1765 = vmatpush1.msra.mxu0 0.0
        %1766 = vmatprep.subr.mxu0 0.0
        %1767 = vmatpush1.msra.mxu0 0.0
        %1768 = vmatprep.subr.mxu0 0.0
        %1769 = vmatpush1.msra.mxu0 0.0
        %1770 = vmatprep.subr.mxu0 0.0
        %1771 = vmatpush1.msra.mxu0 0.0
        %1772 = vmatprep.subr.mxu0 0.0
        %1773 = vmatpush1.msra.mxu0 0.0
        %1774 = vmatprep.subr.mxu0 0.0
        %1775 = vmatpush1.msra.mxu0 0.0
        %1776 = vmatprep.subr.mxu0 0.0
        %1777 = vmatpush1.msra.mxu0 0.0
        %1778 = vmatprep.subr.mxu0 0.0
        %1779 = vmatpush1.msra.mxu0 0.0
        %1780 = vmatprep.subr.mxu0 0.0
        %1781 = vmatpush1.msra.mxu0 0.0
        %1782 = vmatprep.subr.mxu0 0.0
        %1783 = vmatpush1.msra.mxu0 0.0
        %1784 = vmatprep.subr.mxu0 0.0
        %1785 = vmatpush1.msra.mxu0 0.0
        %1786 = vmatprep.subr.mxu0 0.0
        %1787 = vmatpush1.msra.mxu0 0.0
        %1788 = vmatprep.subr.mxu0 0.0
        %1789 = vmatpush1.msra.mxu0 0.0
        %1790 = vmatprep.subr.mxu0 0.0
        %1791 = vmatpush1.msra.mxu0 0.0
        %1792 = vmatprep.subr.mxu0 0.0
        %1793 = vmatpush1.msra.mxu0 0.0
        %1794 = vmatprep.subr.mxu0 0.0
        %1795 = vmatpush1.msra.mxu0 0.0
        %1796 = vmatprep.subr.mxu0 0.0
        %1797 = vmatpush1.msra.mxu0 0.0
        %1798 = vmatprep.subr.mxu0 0.0
        %1799 = vmatpush1.msra.mxu0 0.0
        %1800 = vmatprep.mubr.f32.mxu0 0.0
        %1801 = vmatmul.mubr.f32.gmra.mrb[0].mxu0 %v306
        %v1802 = vpop.f32.mrb[0].mxu0
        %v1803 = vadd.f32 0.0, %v1802
        %v1804 = vpop.f32.mrb[0].mxu0
        %1805 = vmatprep.mubr.f32.mxu0 0.0
        %1806 = vmatmul.mubr.f32.gmra.mrb[0].mxu0 %v309
        %v1807 = vpop.f32.mrb[0].mxu0
        %v1808 = vadd.f32 0.0, %v1807
        %v1809 = vpop.f32.mrb[0].mxu0
        %1810 = vdwg.mxu0
        %v1812 = vsel %vm304, %v378, 0
        %v1815 = vsel %vm304, %v383, 0
        %v1818 = vsel %vm304, %v453, 0
        %v1821 = vsel %vm304, %v458, 0
        %v1824 = vsel %vm304, %v528, 0
        %v1827 = vsel %vm304, %v533, 0
        %v1830 = vsel %vm304, %v603, 0
        %v1833 = vsel %vm304, %v608, 0
        %v1836 = vsel %vm304, %v678, 0
        %v1839 = vsel %vm304, %v683, 0
        %v1842 = vsel %vm304, %v753, 0
        %v1845 = vsel %vm304, %v758, 0
        %v1848 = vsel %vm304, %v828, 0
        %v1851 = vsel %vm304, %v833, 0
        %v1854 = vsel %vm304, %v903, 0
        %v1857 = vsel %vm304, %v908, 0
        %v1860 = vsel %vm304, %v978, 0
        %v1863 = vsel %vm304, %v983, 0
        %v1866 = vsel %vm304, %v1053, 0
        %v1869 = vsel %vm304, %v1058, 0
        %v1872 = vsel %vm304, %v1128, 0
        %v1875 = vsel %vm304, %v1133, 0
        %v1878 = vsel %vm304, %v1203, 0
        %v1881 = vsel %vm304, %v1208, 0
        %v1884 = vsel %vm304, %v1278, 0
        %v1887 = vsel %vm304, %v1283, 0
        %v1890 = vsel %vm304, %v1353, 0
        %v1893 = vsel %vm304, %v1358, 0
        %v1896 = vsel %vm304, %v1428, 0
        %v1899 = vsel %vm304, %v1433, 0
        %v1902 = vsel %vm304, %v1503, 0
        %v1905 = vsel %vm304, %v1508, 0
        %v1908 = vsel %vm304, %v1578, 0
        %v1911 = vsel %vm304, %v1583, 0
        %v1914 = vsel %vm304, %v1653, 0
        %v1917 = vsel %vm304, %v1658, 0
        %v1920 = vsel %vm304, %v1728, 0
        %v1923 = vsel %vm304, %v1733, 0
        %v1926 = vsel %vm304, %v1803, 0
        %v1929 = vsel %vm304, %v1808, 0
        %1931 = vmatprep.subr.mxu0 0.0
        %1932 = vmatpush1.msra.mxu0 %v278
        %1933 = vmatprep.subr.mxu0 0.0
        %1934 = vmatpush1.msra.mxu0 %v279
        %1935 = vmatprep.subr.mxu0 0.0
        %1936 = vmatpush1.msra.mxu0 0.0
        %1937 = vmatprep.subr.mxu0 0.0
        %1938 = vmatpush1.msra.mxu0 0.0
        %1939 = vmatprep.subr.mxu0 0.0
        %1940 = vmatpush1.msra.mxu0 0.0
        %1941 = vmatprep.subr.mxu0 0.0
        %1942 = vmatpush1.msra.mxu0 0.0
        %1943 = vmatprep.subr.mxu0 0.0
        %1944 = vmatpush1.msra.mxu0 0.0
        %1945 = vmatprep.subr.mxu0 0.0
        %1946 = vmatpush1.msra.mxu0 0.0
        %1947 = vmatprep.subr.mxu0 0.0
        %1948 = vmatpush1.msra.mxu0 0.0
        %1949 = vmatprep.subr.mxu0 0.0
        %1950 = vmatpush1.msra.mxu0 0.0
        %1951 = vmatprep.subr.mxu0 0.0
        %1952 = vmatpush1.msra.mxu0 0.0
        %1953 = vmatprep.subr.mxu0 0.0
        %1954 = vmatpush1.msra.mxu0 0.0
        %1955 = vmatprep.subr.mxu0 0.0
        %1956 = vmatpush1.msra.mxu0 0.0
        %1957 = vmatprep.subr.mxu0 0.0
        %1958 = vmatpush1.msra.mxu0 0.0
        %1959 = vmatprep.subr.mxu0 0.0
        %1960 = vmatpush1.msra.mxu0 0.0
        %1961 = vmatprep.subr.mxu0 0.0
        %1962 = vmatpush1.msra.mxu0 0.0
        %1963 = vmatprep.subr.mxu0 0.0
        %1964 = vmatpush1.msra.mxu0 0.0
        %1965 = vmatprep.subr.mxu0 0.0
        %1966 = vmatpush1.msra.mxu0 0.0
        %1967 = vmatprep.subr.mxu0 0.0
        %1968 = vmatpush1.msra.mxu0 0.0
        %1969 = vmatprep.subr.mxu0 0.0
        %1970 = vmatpush1.msra.mxu0 0.0
        %1971 = vmatprep.subr.mxu0 0.0
        %1972 = vmatpush1.msra.mxu0 0.0
        %1973 = vmatprep.subr.mxu0 0.0
        %1974 = vmatpush1.msra.mxu0 0.0
        %1975 = vmatprep.subr.mxu0 0.0
        %1976 = vmatpush1.msra.mxu0 0.0
        %1977 = vmatprep.subr.mxu0 0.0
        %1978 = vmatpush1.msra.mxu0 0.0
        %1979 = vmatprep.subr.mxu0 0.0
        %1980 = vmatpush1.msra.mxu0 0.0
        %1981 = vmatprep.subr.mxu0 0.0
        %1982 = vmatpush1.msra.mxu0 0.0
        %1983 = vmatprep.subr.mxu0 0.0
        %1984 = vmatpush1.msra.mxu0 0.0
        %1985 = vmatprep.subr.mxu0 0.0
        %1986 = vmatpush1.msra.mxu0 0.0
        %1987 = vmatprep.subr.mxu0 0.0
        %1988 = vmatpush1.msra.mxu0 0.0
        %1989 = vmatprep.subr.mxu0 0.0
        %1990 = vmatpush1.msra.mxu0 0.0
        %1991 = vmatprep.subr.mxu0 0.0
        %1992 = vmatpush1.msra.mxu0 0.0
        %1993 = vmatprep.subr.mxu0 0.0
        %1994 = vmatpush1.msra.mxu0 0.0
        %1995 = vmatprep.mubr.f32.mxu0 0.0
        %1996 = vmatmul.mubr.f32.gmra.mrb[0].mxu0 %v1812
        %v1997 = vpop.f32.mrb[0].mxu0
        %v1998 = vadd.f32 0.0, %v1997
        %v1999 = vpop.f32.mrb[0].mxu0
        %2000 = vmatprep.mubr.f32.mxu0 0.0
        %2001 = vmatmul.mubr.f32.gmra.mrb[0].mxu0 %v1815
        %v2002 = vpop.f32.mrb[0].mxu0
        %v2003 = vadd.f32 0.0, %v2002
        %v2004 = vpop.f32.mrb[0].mxu0
        %2005 = vmatprep.mubr.f32.mxu0 0.0
        %2006 = vmatmul.mubr.f32.gmra.mrb[0].mxu0 %v1818
        %v2007 = vpop.f32.mrb[0].mxu0
        %v2008 = vadd.f32 0.0, %v2007
        %v2009 = vpop.f32.mrb[0].mxu0
        %2010 = vmatprep.mubr.f32.mxu0 0.0
        %2011 = vmatmul.mubr.f32.gmra.mrb[0].mxu0 %v1821
        %v2012 = vpop.f32.mrb[0].mxu0
        %v2013 = vadd.f32 0.0, %v2012
        %v2014 = vpop.f32.mrb[0].mxu0
        %2015 = vmatprep.mubr.f32.mxu0 0.0
        %2016 = vmatmul.mubr.f32.gmra.mrb[0].mxu0 %v1824
        %v2017 = vpop.f32.mrb[0].mxu0
        %v2018 = vadd.f32 0.0, %v2017
        %v2019 = vpop.f32.mrb[0].mxu0
        %2020 = vmatprep.mubr.f32.mxu0 0.0
        %2021 = vmatmul.mubr.f32.gmra.mrb[0].mxu0 %v1827
        %v2022 = vpop.f32.mrb[0].mxu0
        %v2023 = vadd.f32 0.0, %v2022
        %v2024 = vpop.f32.mrb[0].mxu0
        %2025 = vmatprep.mubr.f32.mxu0 0.0
        %2026 = vmatmul.mubr.f32.gmra.mrb[0].mxu0 %v1830
        %v2027 = vpop.f32.mrb[0].mxu0
        %v2028 = vadd.f32 0.0, %v2027
        %v2029 = vpop.f32.mrb[0].mxu0
        %2030 = vmatprep.mubr.f32.mxu0 0.0
        %2031 = vmatmul.mubr.f32.gmra.mrb[0].mxu0 %v1833
        %v2032 = vpop.f32.mrb[0].mxu0
        %v2033 = vadd.f32 0.0, %v2032
        %v2034 = vpop.f32.mrb[0].mxu0
        %2035 = vmatprep.mubr.f32.mxu0 0.0
        %2036 = vmatmul.mubr.f32.gmra.mrb[0].mxu0 %v1836
        %v2037 = vpop.f32.mrb[0].mxu0
        %v2038 = vadd.f32 0.0, %v2037
        %v2039 = vpop.f32.mrb[0].mxu0
        %2040 = vmatprep.mubr.f32.mxu0 0.0
        %2041 = vmatmul.mubr.f32.gmra.mrb[0].mxu0 %v1839
        %v2042 = vpop.f32.mrb[0].mxu0
        %v2043 = vadd.f32 0.0, %v2042
        %v2044 = vpop.f32.mrb[0].mxu0
        %2045 = vmatprep.mubr.f32.mxu0 0.0
        %2046 = vmatmul.mubr.f32.gmra.mrb[0].mxu0 %v1842
        %v2047 = vpop.f32.mrb[0].mxu0
        %v2048 = vadd.f32 0.0, %v2047
        %v2049 = vpop.f32.mrb[0].mxu0
        %2050 = vmatprep.mubr.f32.mxu0 0.0
        %2051 = vmatmul.mubr.f32.gmra.mrb[0].mxu0 %v1845
        %v2052 = vpop.f32.mrb[0].mxu0
        %v2053 = vadd.f32 0.0, %v2052
        %v2054 = vpop.f32.mrb[0].mxu0
        %2055 = vmatprep.mubr.f32.mxu0 0.0
        %2056 = vmatmul.mubr.f32.gmra.mrb[0].mxu0 %v1848
        %v2057 = vpop.f32.mrb[0].mxu0
        %v2058 = vadd.f32 0.0, %v2057
        %v2059 = vpop.f32.mrb[0].mxu0
        %2060 = vmatprep.mubr.f32.mxu0 0.0
        %2061 = vmatmul.mubr.f32.gmra.mrb[0].mxu0 %v1851
        %v2062 = vpop.f32.mrb[0].mxu0
        %v2063 = vadd.f32 0.0, %v2062
        %v2064 = vpop.f32.mrb[0].mxu0
        %2065 = vmatprep.mubr.f32.mxu0 0.0
        %2066 = vmatmul.mubr.f32.gmra.mrb[0].mxu0 %v1854
        %v2067 = vpop.f32.mrb[0].mxu0
        %v2068 = vadd.f32 0.0, %v2067
        %v2069 = vpop.f32.mrb[0].mxu0
        %2070 = vmatprep.mubr.f32.mxu0 0.0
        %2071 = vmatmul.mubr.f32.gmra.mrb[0].mxu0 %v1857
        %v2072 = vpop.f32.mrb[0].mxu0
        %v2073 = vadd.f32 0.0, %v2072
        %v2074 = vpop.f32.mrb[0].mxu0
        %2075 = vmatprep.mubr.f32.mxu0 0.0
        %2076 = vmatmul.mubr.f32.gmra.mrb[0].mxu0 %v1860
        %v2077 = vpop.f32.mrb[0].mxu0
        %v2078 = vadd.f32 0.0, %v2077
        %v2079 = vpop.f32.mrb[0].mxu0
        %2080 = vmatprep.mubr.f32.mxu0 0.0
        %2081 = vmatmul.mubr.f32.gmra.mrb[0].mxu0 %v1863
        %v2082 = vpop.f32.mrb[0].mxu0
        %v2083 = vadd.f32 0.0, %v2082
        %v2084 = vpop.f32.mrb[0].mxu0
        %2085 = vmatprep.mubr.f32.mxu0 0.0
        %2086 = vmatmul.mubr.f32.gmra.mrb[0].mxu0 %v1866
        %v2087 = vpop.f32.mrb[0].mxu0
        %v2088 = vadd.f32 0.0, %v2087
        %v2089 = vpop.f32.mrb[0].mxu0
        %2090 = vmatprep.mubr.f32.mxu0 0.0
        %2091 = vmatmul.mubr.f32.gmra.mrb[0].mxu0 %v1869
        %v2092 = vpop.f32.mrb[0].mxu0
        %v2093 = vadd.f32 0.0, %v2092
        %v2094 = vpop.f32.mrb[0].mxu0
        %2095 = vmatprep.mubr.f32.mxu0 0.0
        %2096 = vmatmul.mubr.f32.gmra.mrb[0].mxu0 %v1872
        %v2097 = vpop.f32.mrb[0].mxu0
        %v2098 = vadd.f32 0.0, %v2097
        %v2099 = vpop.f32.mrb[0].mxu0
        %2100 = vmatprep.mubr.f32.mxu0 0.0
        %2101 = vmatmul.mubr.f32.gmra.mrb[0].mxu0 %v1875
        %v2102 = vpop.f32.mrb[0].mxu0
        %v2103 = vadd.f32 0.0, %v2102
        %v2104 = vpop.f32.mrb[0].mxu0
        %2105 = vmatprep.mubr.f32.mxu0 0.0
        %2106 = vmatmul.mubr.f32.gmra.mrb[0].mxu0 %v1878
        %v2107 = vpop.f32.mrb[0].mxu0
        %v2108 = vadd.f32 0.0, %v2107
        %v2109 = vpop.f32.mrb[0].mxu0
        %2110 = vmatprep.mubr.f32.mxu0 0.0
        %2111 = vmatmul.mubr.f32.gmra.mrb[0].mxu0 %v1881
        %v2112 = vpop.f32.mrb[0].mxu0
        %v2113 = vadd.f32 0.0, %v2112
        %v2114 = vpop.f32.mrb[0].mxu0
        %2115 = vmatprep.mubr.f32.mxu0 0.0
        %2116 = vmatmul.mubr.f32.gmra.mrb[0].mxu0 %v1884
        %v2117 = vpop.f32.mrb[0].mxu0
        %v2118 = vadd.f32 0.0, %v2117
        %v2119 = vpop.f32.mrb[0].mxu0
        %2120 = vmatprep.mubr.f32.mxu0 0.0
        %2121 = vmatmul.mubr.f32.gmra.mrb[0].mxu0 %v1887
        %v2122 = vpop.f32.mrb[0].mxu0
        %v2123 = vadd.f32 0.0, %v2122
        %v2124 = vpop.f32.mrb[0].mxu0
        %2125 = vmatprep.mubr.f32.mxu0 0.0
        %2126 = vmatmul.mubr.f32.gmra.mrb[0].mxu0 %v1890
        %v2127 = vpop.f32.mrb[0].mxu0
        %v2128 = vadd.f32 0.0, %v2127
        %v2129 = vpop.f32.mrb[0].mxu0
        %2130 = vmatprep.mubr.f32.mxu0 0.0
        %2131 = vmatmul.mubr.f32.gmra.mrb[0].mxu0 %v1893
        %v2132 = vpop.f32.mrb[0].mxu0
        %v2133 = vadd.f32 0.0, %v2132
        %v2134 = vpop.f32.mrb[0].mxu0
        %2135 = vmatprep.mubr.f32.mxu0 0.0
        %2136 = vmatmul.mubr.f32.gmra.mrb[0].mxu0 %v1896
        %v2137 = vpop.f32.mrb[0].mxu0
        %v2138 = vadd.f32 0.0, %v2137
        %v2139 = vpop.f32.mrb[0].mxu0
        %2140 = vmatprep.mubr.f32.mxu0 0.0
        %2141 = vmatmul.mubr.f32.gmra.mrb[0].mxu0 %v1899
        %v2142 = vpop.f32.mrb[0].mxu0
        %v2143 = vadd.f32 0.0, %v2142
        %v2144 = vpop.f32.mrb[0].mxu0
        %2145 = vmatprep.mubr.f32.mxu0 0.0
        %2146 = vmatmul.mubr.f32.gmra.mrb[0].mxu0 %v1902
        %v2147 = vpop.f32.mrb[0].mxu0
        %v2148 = vadd.f32 0.0, %v2147
        %v2149 = vpop.f32.mrb[0].mxu0
        %2150 = vmatprep.mubr.f32.mxu0 0.0
        %2151 = vmatmul.mubr.f32.gmra.mrb[0].mxu0 %v1905
        %v2152 = vpop.f32.mrb[0].mxu0
        %v2153 = vadd.f32 0.0, %v2152
        %v2154 = vpop.f32.mrb[0].mxu0
        %2155 = vmatprep.mubr.f32.mxu0 0.0
        %2156 = vmatmul.mubr.f32.gmra.mrb[0].mxu0 %v1908
        %v2157 = vpop.f32.mrb[0].mxu0
        %v2158 = vadd.f32 0.0, %v2157
        %v2159 = vpop.f32.mrb[0].mxu0
        %2160 = vmatprep.mubr.f32.mxu0 0.0
        %2161 = vmatmul.mubr.f32.gmra.mrb[0].mxu0 %v1911
        %v2162 = vpop.f32.mrb[0].mxu0
        %v2163 = vadd.f32 0.0, %v2162
        %v2164 = vpop.f32.mrb[0].mxu0
        %2165 = vmatprep.mubr.f32.mxu0 0.0
        %2166 = vmatmul.mubr.f32.gmra.mrb[0].mxu0 %v1914
        %v2167 = vpop.f32.mrb[0].mxu0
        %v2168 = vadd.f32 0.0, %v2167
        %v2169 = vpop.f32.mrb[0].mxu0
        %2170 = vmatprep.mubr.f32.mxu0 0.0
        %2171 = vmatmul.mubr.f32.gmra.mrb[0].mxu0 %v1917
        %v2172 = vpop.f32.mrb[0].mxu0
        %v2173 = vadd.f32 0.0, %v2172
        %v2174 = vpop.f32.mrb[0].mxu0
        %2175 = vmatprep.mubr.f32.mxu0 0.0
        %2176 = vmatmul.mubr.f32.gmra.mrb[0].mxu0 %v1920
        %v2177 = vpop.f32.mrb[0].mxu0
        %v2178 = vadd.f32 0.0, %v2177
        %v2179 = vpop.f32.mrb[0].mxu0
        %2180 = vmatprep.mubr.f32.mxu0 0.0
        %2181 = vmatmul.mubr.f32.gmra.mrb[0].mxu0 %v1923
        %v2182 = vpop.f32.mrb[0].mxu0
        %v2183 = vadd.f32 0.0, %v2182
        %v2184 = vpop.f32.mrb[0].mxu0
        %2185 = vmatprep.mubr.f32.mxu0 0.0
        %2186 = vmatmul.mubr.f32.gmra.mrb[0].mxu0 %v1926
        %v2187 = vpop.f32.mrb[0].mxu0
        %v2188 = vadd.f32 0.0, %v2187
        %v2189 = vpop.f32.mrb[0].mxu0
        %2190 = vmatprep.mubr.f32.mxu0 0.0
        %2191 = vmatmul.mubr.f32.gmra.mrb[0].mxu0 %v1929
        %v2192 = vpop.f32.mrb[0].mxu0
        %v2193 = vadd.f32 0.0, %v2192
        %v2194 = vpop.f32.mrb[0].mxu0
        %2195 = vdwg.mxu0
        %v2196 = vmul.f32 %v1998, %v1998
        %v2197 = vmul.f32 %v2003, %v2003
        %v2198 = vmul.f32 %v2008, %v2008
        %v2199 = vmul.f32 %v2013, %v2013
        %v2200 = vmul.f32 %v2018, %v2018
        %v2201 = vmul.f32 %v2023, %v2023
        %v2202 = vmul.f32 %v2028, %v2028
        %v2203 = vmul.f32 %v2033, %v2033
        %v2204 = vmul.f32 %v2038, %v2038
        %v2205 = vmul.f32 %v2043, %v2043
        %v2206 = vmul.f32 %v2048, %v2048
        %v2207 = vmul.f32 %v2053, %v2053
        %v2208 = vmul.f32 %v2058, %v2058
        %v2209 = vmul.f32 %v2063, %v2063
        %v2210 = vmul.f32 %v2068, %v2068
        %v2211 = vmul.f32 %v2073, %v2073
        %v2212 = vmul.f32 %v1998, %v2038
        %v2213 = vmul.f32 %v2003, %v2043
        %v2214 = vmul.f32 %v2008, %v2048
        %v2215 = vmul.f32 %v2013, %v2053
        %v2216 = vmul.f32 %v2018, %v2058
        %v2217 = vmul.f32 %v2023, %v2063
        %v2218 = vmul.f32 %v2028, %v2068
        %v2219 = vmul.f32 %v2033, %v2073
        %v2220 = vsub.f32 %v2078, %v2196
        %v2221 = vsub.f32 %v2083, %v2197
        %v2222 = vsub.f32 %v2088, %v2198
        %v2223 = vsub.f32 %v2093, %v2199
        %v2224 = vsub.f32 %v2098, %v2200
        %v2225 = vsub.f32 %v2103, %v2201
        %v2226 = vsub.f32 %v2108, %v2202
        %v2227 = vsub.f32 %v2113, %v2203
        %v2228 = vsub.f32 %v2118, %v2204
        %v2229 = vsub.f32 %v2123, %v2205
        %v2230 = vsub.f32 %v2128, %v2206
        %v2231 = vsub.f32 %v2133, %v2207
        %v2232 = vsub.f32 %v2138, %v2208
        %v2233 = vsub.f32 %v2143, %v2209
        %v2234 = vsub.f32 %v2148, %v2210
        %v2235 = vsub.f32 %v2153, %v2211
        %v2236 = vsub.f32 %v2158, %v2212
        %v2237 = vsub.f32 %v2163, %v2213
        %v2238 = vsub.f32 %v2168, %v2214
        %v2239 = vsub.f32 %v2173, %v2215
        %v2240 = vsub.f32 %v2178, %v2216
        %v2241 = vsub.f32 %v2183, %v2217
        %v2242 = vsub.f32 %v2188, %v2218
        %v2243 = vsub.f32 %v2193, %v2219
        %v2244 = vmul.f32 %v2212, 2.0
        %v2245 = vmul.f32 %v2213, 2.0
        %v2246 = vmul.f32 %v2214, 2.0
        %v2247 = vmul.f32 %v2215, 2.0
        %v2248 = vmul.f32 %v2216, 2.0
        %v2249 = vmul.f32 %v2217, 2.0
        %v2250 = vmul.f32 %v2218, 2.0
        %v2251 = vmul.f32 %v2219, 2.0
        %v2252 = vadd.f32 %v2244, 0.0001
        %v2253 = vadd.f32 %v2245, 0.0001
        %v2254 = vadd.f32 %v2246, 0.0001
        %v2255 = vadd.f32 %v2247, 0.0001
        %v2256 = vadd.f32 %v2248, 0.0001
        %v2257 = vadd.f32 %v2249, 0.0001
        %v2258 = vadd.f32 %v2250, 0.0001
        %v2259 = vadd.f32 %v2251, 0.0001
        %v2260 = vmul.f32 %v2236, 2.0
        %v2261 = vmul.f32 %v2237, 2.0
        %v2262 = vmul.f32 %v2238, 2.0
        %v2263 = vmul.f32 %v2239, 2.0
        %v2264 = vmul.f32 %v2240, 2.0
        %v2265 = vmul.f32 %v2241, 2.0
        %v2266 = vmul.f32 %v2242, 2.0
        %v2267 = vmul.f32 %v2243, 2.0
        %v2268 = vadd.f32 %v2260, 0.0009
        %v2269 = vadd.f32 %v2261, 0.0009
        %v2270 = vadd.f32 %v2262, 0.0009
        %v2271 = vadd.f32 %v2263, 0.0009
        %v2272 = vadd.f32 %v2264, 0.0009
        %v2273 = vadd.f32 %v2265, 0.0009
        %v2274 = vadd.f32 %v2266, 0.0009
        %v2275 = vadd.f32 %v2267, 0.0009
        %v2276 = vmul.f32 %v2252, %v2268
        %v2277 = vmul.f32 %v2253, %v2269
        %v2278 = vmul.f32 %v2254, %v2270
        %v2279 = vmul.f32 %v2255, %v2271
        %v2280 = vmul.f32 %v2256, %v2272
        %v2281 = vmul.f32 %v2257, %v2273
        %v2282 = vmul.f32 %v2258, %v2274
        %v2283 = vmul.f32 %v2259, %v2275
        %v2284 = vadd.f32 %v2196, %v2204
        %v2285 = vadd.f32 %v2197, %v2205
        %v2286 = vadd.f32 %v2198, %v2206
        %v2287 = vadd.f32 %v2199, %v2207
        %v2288 = vadd.f32 %v2200, %v2208
        %v2289 = vadd.f32 %v2201, %v2209
        %v2290 = vadd.f32 %v2202, %v2210
        %v2291 = vadd.f32 %v2203, %v2211
        %v2292 = vadd.f32 %v2284, 0.0001
        %v2293 = vadd.f32 %v2285, 0.0001
        %v2294 = vadd.f32 %v2286, 0.0001
        %v2295 = vadd.f32 %v2287, 0.0001
        %v2296 = vadd.f32 %v2288, 0.0001
        %v2297 = vadd.f32 %v2289, 0.0001
        %v2298 = vadd.f32 %v2290, 0.0001
        %v2299 = vadd.f32 %v2291, 0.0001
        %v2300 = vadd.f32 %v2220, %v2228
        %v2301 = vadd.f32 %v2221, %v2229
        %v2302 = vadd.f32 %v2222, %v2230
        %v2303 = vadd.f32 %v2223, %v2231
        %v2304 = vadd.f32 %v2224, %v2232
        %v2305 = vadd.f32 %v2225, %v2233
        %v2306 = vadd.f32 %v2226, %v2234
        %v2307 = vadd.f32 %v2227, %v2235
        %v2308 = vadd.f32 %v2300, 0.0009
        %v2309 = vadd.f32 %v2301, 0.0009
        %v2310 = vadd.f32 %v2302, 0.0009
        %v2311 = vadd.f32 %v2303, 0.0009
        %v2312 = vadd.f32 %v2304, 0.0009
        %v2313 = vadd.f32 %v2305, 0.0009
        %v2314 = vadd.f32 %v2306, 0.0009
        %v2315 = vadd.f32 %v2307, 0.0009
        %v2316 = vmul.f32 %v2292, %v2308
        %v2317 = vmul.f32 %v2293, %v2309
        %v2318 = vmul.f32 %v2294, %v2310
        %v2319 = vmul.f32 %v2295, %v2311
        %v2320 = vmul.f32 %v2296, %v2312
        %v2321 = vmul.f32 %v2297, %v2313
        %v2322 = vmul.f32 %v2298, %v2314
        %v2323 = vmul.f32 %v2299, %v2315
        %v2324 = vrcp.pop %v2316
        %v2325 = vmul.f32 %v2276, %v2324
        %v2326 = vrcp.pop %v2317
        %v2327 = vmul.f32 %v2277, %v2326
        %v2328 = vrcp.pop %v2318
        %v2329 = vmul.f32 %v2278, %v2328
        %v2330 = vrcp.pop %v2319
        %v2331 = vmul.f32 %v2279, %v2330
        %v2332 = vrcp.pop %v2320
        %v2333 = vmul.f32 %v2280, %v2332
        %v2334 = vrcp.pop %v2321
        %v2335 = vmul.f32 %v2281, %v2334
        %v2336 = vrcp.pop %v2322
        %v2337 = vmul.f32 %v2282, %v2336
        %v2338 = vrcp.pop %v2323
        %v2339 = vmul.f32 %v2283, %v2338
        %v2340 = vmax.f32 %v2325, 0.0
        %v2341 = vmax.f32 %v2327, 0.0
        %v2342 = vmax.f32 %v2329, 0.0
        %v2343 = vmax.f32 %v2331, 0.0
        %v2344 = vmax.f32 %v2333, 0.0
        %v2345 = vmax.f32 %v2335, 0.0
        %v2346 = vmax.f32 %v2337, 0.0
        %v2347 = vmax.f32 %v2339, 0.0
        %v2348 = vmin.f32 %v2340, 1.0
        %v2349 = vmin.f32 %v2341, 1.0
        %v2350 = vmin.f32 %v2342, 1.0
        %v2351 = vmin.f32 %v2343, 1.0
        %v2352 = vmin.f32 %v2344, 1.0
        %v2353 = vmin.f32 %v2345, 1.0
        %v2354 = vmin.f32 %v2346, 1.0
        %v2355 = vmin.f32 %v2347, 1.0
        %v2356 = vsub.f32 %v260, %v268
        %v2357 = vsub.f32 %v261, %v269
        %v2358 = vsub.f32 %v262, %v270
        %v2359 = vsub.f32 %v263, %v271
        %v2360 = vsub.f32 %v264, %v272
        %v2361 = vsub.f32 %v265, %v273
        %v2362 = vsub.f32 %v266, %v274
        %v2363 = vsub.f32 %v267, %v275
        %v2364 = vmul.f32 %v2356, %v2356
        %v2365 = vmul.f32 %v2357, %v2357
        %v2366 = vmul.f32 %v2358, %v2358
        %v2367 = vmul.f32 %v2359, %v2359
        %v2368 = vmul.f32 %v2360, %v2360
        %v2369 = vmul.f32 %v2361, %v2361
        %v2370 = vmul.f32 %v2362, %v2362
        %v2371 = vmul.f32 %v2363, %v2363
        %v2372 = vsel %vm304, %v2364, 0.0
        %v2373 = vsel %vm304, %v2365, 0.0
        %v2374 = vadd.f32 %v2372, %v2373
        %v2375 = vsel %vm304, %v2366, 0.0
        %v2376 = vadd.f32 %v2374, %v2375
        %v2377 = vsel %vm304, %v2367, 0.0
        %v2378 = vadd.f32 %v2376, %v2377
        %v2379 = vsel %vm304, %v2368, 0.0
        %v2380 = vadd.f32 %v2378, %v2379
        %v2381 = vsel %vm304, %v2369, 0.0
        %v2382 = vadd.f32 %v2380, %v2381
        %v2383 = vsel %vm304, %v2370, 0.0
        %v2384 = vadd.f32 %v2382, %v2383
        %v2385 = vsel %vm304, %v2371, 0.0
        %v2386 = vadd.f32 %v2384, %v2385
        %2387 = vadd.xlane.f32.xlu0 %v2386
        %v2388 = vpop.xlane.xlu0 %2387
        %v2389 = vrot.slane %v2388, 4
        %v2390 = vadd.f32 %v2388, %v2389
        %v2391 = vrot.slane %v2390, 2
        %v2392 = vadd.f32 %v2390, %v2391
        %v2393 = vrot.slane %v2392, 1
        %v2394 = vadd.f32 %v2392, %v2393
        %s2395 = vtos %v2394
        %v2396 = vsel %vm304, %v2348, 0.0
        %v2397 = vsel %vm304, %v2349, 0.0
        %v2398 = vadd.f32 %v2396, %v2397
        %v2399 = vsel %vm304, %v2350, 0.0
        %v2400 = vadd.f32 %v2398, %v2399
        %v2401 = vsel %vm304, %v2351, 0.0
        %v2402 = vadd.f32 %v2400, %v2401
        %v2403 = vsel %vm304, %v2352, 0.0
        %v2404 = vadd.f32 %v2402, %v2403
        %v2405 = vsel %vm304, %v2353, 0.0
        %v2406 = vadd.f32 %v2404, %v2405
        %v2407 = vsel %vm304, %v2354, 0.0
        %v2408 = vadd.f32 %v2406, %v2407
        %v2409 = vsel %vm304, %v2355, 0.0
        %v2410 = vadd.f32 %v2408, %v2409
        %2411 = vadd.xlane.f32.xlu0 %v2410
        %v2412 = vpop.xlane.xlu0 %2411
        %v2413 = vrot.slane %v2412, 4
        %v2414 = vadd.f32 %v2412, %v2413
        %v2415 = vrot.slane %v2414, 2
        %v2416 = vadd.f32 %v2414, %v2415
        %v2417 = vrot.slane %v2416, 1
        %v2418 = vadd.f32 %v2416, %v2417
        %s2419 = vtos %v2418
        %v2420 = vlaneseq
        %v2421 = vshrl.u32 %v2420, 7
        %v2422 = vlaneseq
        %v2423 = vand.u32 %v2422, 127
        %vm2424 = vcmp.eq.s32.totalorder %v2421, 0
        %vm2425 = vcmp.eq.s32.totalorder %v2423, 0
        %vm2426 = vmand %vm2424, %vm2425
        %vm2427 = vcmp.eq.s32.totalorder %v2423, 1
        %vm2428 = vmand %vm2424, %vm2427
        %v2429 = vstv %s2419
        %v2430 = vsel %vm2428, %v2429, 0.0
        %v2431 = vstv %s2395
        %v2432 = vsel %vm2426, %v2431, %v2430
        %2433 = vst [vmem:[%s259] sm:$0xff] %v2432
        %p2434 = scmp.lt.s32.totalorder %s21, 1
        %s2435 = scalar_select %p2434, %s21, 1
        %s2436 = smul.addr %s2435, 8
        %s2437 = scalar_lea.vmem %s4, %s2436
        // Predicated region
        $region45: #{reconstruction_loss.1} parent=35 // pred_check
          %p2438 = pneg %p133
        $region46: #{reconstruction_loss.1} parent=35 // pred_check_branch
          %2440 = sbr.rel (%p2438) target = $region48
        $region47: #{reconstruction_loss.1} parent=35 // pred_region
          _
        $region48: #{reconstruction_loss.1} parent=35 // pred_fallthru
          _
      $region36: #{reconstruction_loss.1} parent=5 // pred_fallthru
        _
      %p2441 = scmp.le.s32.totalorder 2, %s16
      // Predicated region
      $region49: #{reconstruction_loss.1} parent=5 // pred_check
        %p2442 = pneg %p2441
      $region50: #{reconstruction_loss.1} parent=5 // pred_check_branch
        %2444 = sbr.rel (%p2442) target = $region52
      $region51: #{reconstruction_loss.1} parent=5 // pred_region
        %s2445 = ssub.s32 %s16, 2
        // Predicated region
        $region53: #{reconstruction_loss.1} parent=51 // pred_check
          %p2446 = pneg %p139
        $region54: #{reconstruction_loss.1} parent=51 // pred_check_branch
          %2448 = sbr.rel (%p2446) target = $region56
        $region55: #{reconstruction_loss.1} parent=51 // pred_region
          %p2449 = scmp.lt.s32.totalorder %s22, 1
          %s2450 = scalar_select %p2449, %s22, 1
          %s2451 = smul.addr %s2450, 8
          %s2452 = scalar_lea.vmem %s4, %s2451
        $region56: #{reconstruction_loss.1} parent=51 // pred_fallthru
          _
      $region52: #{reconstruction_loss.1} parent=5 // pred_fallthru
        _
    $region6: #{reconstruction_loss.1} parent=1 // loop_footer
      %s20 = sadd.s32 1, %s16
    $region7: #{reconstruction_loss.1} parent=1 // loop_footer_branch
      %15 = sbr.rel target = $region3
    $region8: #{reconstruction_loss.1} parent=1 // loop_exit
      _
    %2453 = vsyncpa [#allocation3], 1
    %s2454 = scalar_lea.sflag [#allocation3], 1
    %2455 = vsyncpa %s2454, 1
    %2456 = vsyncpa [#allocation5], 1
    %s2457 = scalar_lea.sflag [#allocation5], 1
    %2458 = vsyncpa %s2457, 1

</llo_original>
